<compile_context>
chip_gen: v7x
topology: tpu7x:2x2x1
jax: 0.10.0
libtpu: 0.0.40
codegen_flags: <defaults>
</compile_context>

<pallas_src>
import math
import numpy as np
import jax
import jax.numpy as jnp
from jax.experimental import pallas as pl
from jax.experimental.pallas import tpu as pltpu


def _round_up(x, m):
    return ((x + m - 1) // m) * m


def wordprob_kernel(ds_ref, ac_ref, y_ref, xids_ref, att_ref,
                    w1_ref, w2_ref, w3_ref, b_ds_ref,
                    wl_ref, bl_ref,
                    v1_ref, v2_ref, v3_ref, bv_ref,
                    pw_ref, omp_ref):
    # ---- load row tile (f32), cast to bf16 only for the MXU operands ----
    ds = ds_ref[...]                                   # (TN, H)  f32
    ac = ac_ref[...]                                   # (TN, C)  f32
    ye = y_ref[...]                                    # (TN, Dy) f32
    dsb = ds.astype(jnp.bfloat16)
    acb = ac.astype(jnp.bfloat16)
    yeb = ye.astype(jnp.bfloat16)

    # l1 = tanh(h @ w_ds^T + b_ds), with h = cat(ds, ac, y_emb) done implicitly
    # by splitting the weight row-wise (avoids materializing the concat in HBM).
    z = (jnp.dot(dsb, w1_ref[...], preferred_element_type=jnp.float32)
         + jnp.dot(acb, w2_ref[...], preferred_element_type=jnp.float32)
         + jnp.dot(yeb, w3_ref[...], preferred_element_type=jnp.float32)
         + b_ds_ref[...])                              # (TN, H) f32
    l1 = jnp.tanh(z)

    # logits over the padded vocab; pad/ext columns carry bias = -1e30 so the
    # softmax produces exact zeros there (mimics cat(p_vocab, zeros)).
    logits = (jnp.dot(l1.astype(jnp.bfloat16), wl_ref[...],
                      preferred_element_type=jnp.float32)
              + bl_ref[...])                           # (TN, Vp) f32
    m = jnp.max(logits, axis=-1, keepdims=True)
    e = jnp.exp(logits - m)
    denom = jnp.sum(e, axis=-1, keepdims=True)
    p_vocab = e * pl.reciprocal(denom, approx=True)    # (TN, Vp)

    # p_gen = clamp(sigmoid(h . v + bv), 0.001, 0.999) as a VPU/XLU reduction
    # (f32 inputs -> exact), no width-1 MXU pass.
    pg = (jnp.sum(ds * v1_ref[...], axis=-1, keepdims=True)
          + jnp.sum(ac * v2_ref[...], axis=-1, keepdims=True)
          + jnp.sum(ye * v3_ref[...], axis=-1, keepdims=True)
          + bv_ref[0, 0])                              # (TN, 1)
    p_gen = jnp.clip(jax.nn.sigmoid(pg), 0.001, 0.999)
    one_m = 1.0 - p_gen
    omp_ref[...] = one_m

    # scatter_add(2, xids, (1 - p_gen) * att_dist) via compare+select,
    # chunked along the vocab (lane) axis to bound accumulator live ranges.
    xids = xids_ref[...]                               # (TN, S) int32
    wsc = one_m * att_ref[...]                         # (TN, S) f32
    Vp = pw_ref.shape[1]
    S = xids.shape[1]

    chunk = 128
    for c in (2048, 1024, 512, 256, 128):
        if Vp % c == 0:
            chunk = c
            break

    for c0 in range(0, Vp, chunk):
        ids = jax.lax.broadcasted_iota(jnp.int32, (1, chunk), 1) + c0
        acc = p_gen * p_vocab[:, c0:c0 + chunk]        # (TN, chunk)
        for s in range(S):
            acc = acc + jnp.where(xids[:, s:s + 1] == ids, wsc[:, s:s + 1], 0.0)
        pw_ref[:, c0:c0 + chunk] = acc


def word_prob_layer(ds, ac, y_emb, att_dist, xids, params, max_ext_len,
                    row_tile=256):
    """ds:(T,B,H) ac:(T,B,C) y_emb:(T,B,Dy) att_dist:(T,B,S) xids:(T,B,S) int32."""
    T_, B_, H = ds.shape
    C = ac.shape[2]
    Dy = y_emb.shape[2]
    V = params["w_logit"].shape[0]
    S = xids.shape[2]
    Vext = V + max_ext_len
    Vp = _round_up(max(Vext, 128), 128)                # lane-dense output width
    N = T_ * B_

    TN = min(_round_up(row_tile, 8), _round_up(N, 8))
    N_pad = _round_up(N, TN)
    grid = (N_pad // TN,)

    def flat_pad(x, dtype):
        x2 = x.reshape(N, -1).astype(dtype)
        if N_pad > N:
            x2 = jnp.pad(x2, ((0, N_pad - N), (0, 0)))
        return x2

    ds2 = flat_pad(ds, jnp.float32)
    ac2 = flat_pad(ac, jnp.float32)
    y2 = flat_pad(y_emb, jnp.float32)
    xids2 = flat_pad(xids, jnp.int32)                  # pad rows: id 0, att 0 -> no effect
    att2 = flat_pad(att_dist, jnp.float32)

    # split weights row-wise so the kernel never needs the explicit concat
    w_ds_t = params["w_ds"].T                          # (Din, H)
    w1 = w_ds_t[:H].astype(jnp.bfloat16)               # (H, H)
    w2 = w_ds_t[H:H + C].astype(jnp.bfloat16)          # (C, H)
    w3 = w_ds_t[H + C:].astype(jnp.bfloat16)           # (Dy, H)
    b_ds = params["b_ds"].reshape(1, H).astype(jnp.float32)

    wl = jnp.zeros((H, Vp), jnp.bfloat16).at[:, :V].set(
        params["w_logit"].T.astype(jnp.bfloat16))      # (H, Vp)
    bl = jnp.full((1, Vp), -1e30, jnp.float32).at[:, :V].set(
        params["b_logit"].reshape(1, V).astype(jnp.float32))

    v = params["v"].reshape(1, -1).astype(jnp.float32)  # (1, Din)
    v1 = v[:, :H]
    v2 = v[:, H:H + C]
    v3 = v[:, H + C:]
    bv = params["bv"].reshape(1, 1).astype(jnp.float32)

    rows = lambda i: (i, 0)
    fixed = lambda i: (0, 0)

    in_specs = [
        pl.BlockSpec((TN, H), rows),                   # ds
        pl.BlockSpec((TN, C), rows),                   # ac
        pl.BlockSpec((TN, Dy), rows),                  # y_emb
        pl.BlockSpec((TN, S), rows),                   # xids
        pl.BlockSpec((TN, S), rows),                   # att_dist
        pl.BlockSpec((H, H), fixed),                   # w1 (resident)
        pl.BlockSpec((C, H), fixed),                   # w2
        pl.BlockSpec((Dy, H), fixed),                  # w3
        pl.BlockSpec((1, H), fixed),                   # b_ds
        pl.BlockSpec((H, Vp), fixed),                  # w_logit (padded, bf16)
        pl.BlockSpec((1, Vp), fixed),                  # b_logit (padded with -1e30)
        pl.BlockSpec((1, H), fixed),                   # v1
        pl.BlockSpec((1, C), fixed),                   # v2
        pl.BlockSpec((1, Dy), fixed),                  # v3
        pl.BlockSpec(memory_space=pltpu.MemorySpace.SMEM),  # bv scalar
    ]
    out_specs = (
        pl.BlockSpec((TN, Vp), rows),                  # p_w (lane-dense, padded)
        pl.BlockSpec((TN, 1), rows),                   # 1 - p_gen
    )

    pw, omp = pl.pallas_call(
        wordprob_kernel,
        out_shape=(jax.ShapeDtypeStruct((N_pad, Vp), jnp.float32),
                   jax.ShapeDtypeStruct((N_pad, 1), jnp.float32)),
        grid=grid,
        in_specs=in_specs,
        out_specs=out_specs,
        compiler_params=pltpu.CompilerParams(
            dimension_semantics=("parallel",),
            vmem_limit_bytes=64 * 1024 * 1024),
    )(ds2, ac2, y2, xids2, att2, w1, w2, w3, b_ds, wl, bl, v1, v2, v3, bv)

    pw = pw[:N, :Vext].reshape(T_, B_, Vext)
    omp = omp[:N].reshape(T_, B_, 1)
    return pw, omp


# ---------------- pure-JAX reference (for correctness check) ----------------
def ref_forward(ds, ac, y_emb, att_dist, xids, params, max_ext_len):
    h = jnp.concatenate([ds, ac, y_emb], axis=2)
    l1 = jnp.tanh(h @ params["w_ds"].T + params["b_ds"])
    logits = l1 @ params["w_logit"].T + params["b_logit"]
    p_vocab = jax.nn.softmax(logits, axis=2)
    if max_ext_len > 0:
        z = jnp.zeros(p_vocab.shape[:2] + (max_ext_len,), p_vocab.dtype)
        p_vocab = jnp.concatenate([p_vocab, z], axis=2)
    p_gen = jax.nn.sigmoid(h @ params["v"].T + params["bv"])
    p_gen = jnp.clip(p_gen, 0.001, 0.999)
    Vext = p_vocab.shape[2]
    add = (1.0 - p_gen) * att_dist
    onehot = jax.nn.one_hot(xids, Vext, dtype=p_vocab.dtype)          # (T,B,S,Vext)
    contrib = jnp.einsum("tbs,tbsv->tbv", add, onehot)
    return p_gen * p_vocab + contrib, 1.0 - p_gen


def xavier_uniform(key, shape):
    fan_out, fan_in = shape
    limit = math.sqrt(6.0 / (fan_in + fan_out))
    return jax.random.uniform(key, shape, jnp.float32, -limit, limit)


if __name__ == "__main__":
    # small, forward-consistent shapes
    T_, B_ = 8, 2                 # seq len, batch
    H, C, Dy = 32, 32, 16         # hidden_size, ctx_size, dim_y
    V = 64                        # dict_size
    S = 8                         # source positions for the copy distribution
    max_ext_len = 4
    Din = H + C + Dy

    key = jax.random.PRNGKey(0)
    ks = jax.random.split(key, 10)

    params = {
        "w_ds": xavier_uniform(ks[0], (H, Din)),
        "b_ds": jnp.zeros((H,), jnp.float32),
        "w_logit": xavier_uniform(ks[1], (V, H)),
        "b_logit": jnp.zeros((V,), jnp.float32),
        "v": xavier_uniform(ks[2], (1, Din)),
        "bv": jnp.zeros((1,), jnp.float32),
    }

    ds = jax.random.normal(ks[3], (T_, B_, H), jnp.float32)
    ac = jax.random.normal(ks[4], (T_, B_, C), jnp.float32)
    y_emb = jax.random.normal(ks[5], (T_, B_, Dy), jnp.float32)
    att_logits = jax.random.normal(ks[6], (T_, B_, S), jnp.float32)
    att_dist = jax.nn.softmax(att_logits, axis=2)
    xids = jax.random.randint(ks[7], (T_, B_, S), 0, V + max_ext_len, jnp.int32)

    # row_tile=8 -> grid of 2 steps at these toy shapes (exercises the row grid)
    p_w, one_minus_pgen = word_prob_layer(
        ds, ac, y_emb, att_dist, xids, params, max_ext_len, row_tile=8)
    jax.block_until_ready((p_w, one_minus_pgen))

    p_w_ref, omp_ref = ref_forward(ds, ac, y_emb, att_dist, xids, params, max_ext_len)
    # bf16 MXU operands + approx reciprocal -> loosened tolerance on p_w;
    # p_gen path is f32 so 1 - p_gen stays tight.
    np.testing.assert_allclose(np.asarray(p_w), np.asarray(p_w_ref),
                               rtol=5e-2, atol=5e-3)
    np.testing.assert_allclose(np.asarray(one_minus_pgen), np.asarray(omp_ref),
                               rtol=1e-4, atol=1e-5)

    print("KERNEL_OK")
</pallas_src>

<mosaic_0001>
module attributes {stable_mosaic.version = 11 : i64} {
  func.func @wordprob_kernel(%arg0: i32, %arg1: memref<8x32xf32, #tpu.memory_space<vmem>>, %arg2: memref<8x32xf32, #tpu.memory_space<vmem>>, %arg3: memref<8x16xf32, #tpu.memory_space<vmem>>, %arg4: memref<8x8xi32, #tpu.memory_space<vmem>>, %arg5: memref<8x8xf32, #tpu.memory_space<vmem>>, %arg6: memref<32x32xbf16, #tpu.memory_space<vmem>>, %arg7: memref<32x32xbf16, #tpu.memory_space<vmem>>, %arg8: memref<16x32xbf16, #tpu.memory_space<vmem>>, %arg9: memref<1x32xf32, #tpu.memory_space<vmem>>, %arg10: memref<32x128xbf16, #tpu.memory_space<vmem>>, %arg11: memref<1x128xf32, #tpu.memory_space<vmem>>, %arg12: memref<1x32xf32, #tpu.memory_space<vmem>>, %arg13: memref<1x32xf32, #tpu.memory_space<vmem>>, %arg14: memref<1x16xf32, #tpu.memory_space<vmem>>, %arg15: memref<1x1xf32, #tpu.memory_space<smem>>, %arg16: memref<8x128xf32, #tpu.memory_space<vmem>>, %arg17: memref<8x1xf32, #tpu.memory_space<vmem>>) attributes {dimension_semantics = [#tpu.dimension_semantics<parallel>], iteration_bounds = array<i64: 2>, scalar_prefetch = 0 : i64, scratch_operands = 0 : i64, tpu.core_type = #tpu.core_type<tc>, window_params = [{transform_indices = @transform_0, window_bounds = array<i64: 8, 32>}, {transform_indices = @transform_1, window_bounds = array<i64: 8, 32>}, {transform_indices = @transform_2, window_bounds = array<i64: 8, 16>}, {transform_indices = @transform_3, window_bounds = array<i64: 8, 8>}, {transform_indices = @transform_4, window_bounds = array<i64: 8, 8>}, {pipeline_mode = #tpu.pipeline_mode<synchronous>, transform_indices = @transform_5, window_bounds = array<i64: 32, 32>}, {pipeline_mode = #tpu.pipeline_mode<synchronous>, transform_indices = @transform_6, window_bounds = array<i64: 32, 32>}, {pipeline_mode = #tpu.pipeline_mode<synchronous>, transform_indices = @transform_7, window_bounds = array<i64: 16, 32>}, {pipeline_mode = #tpu.pipeline_mode<synchronous>, transform_indices = @transform_8, window_bounds = array<i64: 1, 32>}, {pipeline_mode = #tpu.pipeline_mode<synchronous>, transform_indices = @transform_9, window_bounds = array<i64: 32, 128>}, {pipeline_mode = #tpu.pipeline_mode<synchronous>, transform_indices = @transform_10, window_bounds = array<i64: 1, 128>}, {pipeline_mode = #tpu.pipeline_mode<synchronous>, transform_indices = @transform_11, window_bounds = array<i64: 1, 32>}, {pipeline_mode = #tpu.pipeline_mode<synchronous>, transform_indices = @transform_12, window_bounds = array<i64: 1, 32>}, {pipeline_mode = #tpu.pipeline_mode<synchronous>, transform_indices = @transform_13, window_bounds = array<i64: 1, 16>}, {transform_indices = @transform_14, window_bounds = array<i64: 1, 1>}, {transform_indices = @transform_15, window_bounds = array<i64: 8, 128>}, {transform_indices = @transform_16, window_bounds = array<i64: 8, 1>}]} {
    %c0 = arith.constant 0 : index
    %c0_0 = arith.constant 0 : index
    %0 = vector.load %arg1[%c0, %c0_0] : memref<8x32xf32, #tpu.memory_space<vmem>>, vector<8x32xf32>
    %c0_1 = arith.constant 0 : index
    %c0_2 = arith.constant 0 : index
    %1 = vector.load %arg2[%c0_1, %c0_2] : memref<8x32xf32, #tpu.memory_space<vmem>>, vector<8x32xf32>
    %c0_3 = arith.constant 0 : index
    %c0_4 = arith.constant 0 : index
    %2 = vector.load %arg3[%c0_3, %c0_4] : memref<8x16xf32, #tpu.memory_space<vmem>>, vector<8x16xf32>
    %3 = arith.truncf %0 : vector<8x32xf32> to vector<8x32xbf16>
    %4 = arith.truncf %1 : vector<8x32xf32> to vector<8x32xbf16>
    %5 = arith.truncf %2 : vector<8x16xf32> to vector<8x16xbf16>
    %c0_5 = arith.constant 0 : index
    %c0_6 = arith.constant 0 : index
    %6 = vector.load %arg6[%c0_5, %c0_6] : memref<32x32xbf16, #tpu.memory_space<vmem>>, vector<32x32xbf16>
    %cst = arith.constant dense<0.000000e+00> : vector<8x32xf32>
    %7 = tpu.matmul %3, %6, %cst {dimension_numbers = #tpu.dot_dimension_numbers<[1], [0], [0], [1], [0, 0, 1, 1], [], []>} : vector<8x32xbf16>, vector<32x32xbf16>, vector<8x32xf32> -> vector<8x32xf32>
    %c0_7 = arith.constant 0 : index
    %c0_8 = arith.constant 0 : index
    %8 = vector.load %arg7[%c0_7, %c0_8] : memref<32x32xbf16, #tpu.memory_space<vmem>>, vector<32x32xbf16>
    %cst_9 = arith.constant dense<0.000000e+00> : vector<8x32xf32>
    %9 = tpu.matmul %4, %8, %cst_9 {dimension_numbers = #tpu.dot_dimension_numbers<[1], [0], [0], [1], [0, 0, 1, 1], [], []>} : vector<8x32xbf16>, vector<32x32xbf16>, vector<8x32xf32> -> vector<8x32xf32>
    %10 = arith.addf %7, %9 : vector<8x32xf32>
    %c0_10 = arith.constant 0 : index
    %c0_11 = arith.constant 0 : index
    %11 = vector.load %arg8[%c0_10, %c0_11] : memref<16x32xbf16, #tpu.memory_space<vmem>>, vector<16x32xbf16>
    %cst_12 = arith.constant dense<0.000000e+00> : vector<8x32xf32>
    %12 = tpu.matmul %5, %11, %cst_12 {dimension_numbers = #tpu.dot_dimension_numbers<[1], [0], [0], [1], [0, 0, 1, 1], [], []>} : vector<8x16xbf16>, vector<16x32xbf16>, vector<8x32xf32> -> vector<8x32xf32>
    %13 = arith.addf %10, %12 : vector<8x32xf32>
    %c0_13 = arith.constant 0 : index
    %c0_14 = arith.constant 0 : index
    %14 = vector.load %arg9[%c0_13, %c0_14] : memref<1x32xf32, #tpu.memory_space<vmem>>, vector<1x32xf32>
    %15 = vector.broadcast %14 : vector<1x32xf32> to vector<8x32xf32>
    %16 = arith.addf %13, %15 : vector<8x32xf32>
    %17 = math.tanh %16 : vector<8x32xf32>
    %18 = arith.truncf %17 : vector<8x32xf32> to vector<8x32xbf16>
    %c0_15 = arith.constant 0 : index
    %c0_16 = arith.constant 0 : index
    %19 = vector.load %arg10[%c0_15, %c0_16] : memref<32x128xbf16, #tpu.memory_space<vmem>>, vector<32x128xbf16>
    %cst_17 = arith.constant dense<0.000000e+00> : vector<8x128xf32>
    %20 = tpu.matmul %18, %19, %cst_17 {dimension_numbers = #tpu.dot_dimension_numbers<[1], [0], [0], [1], [0, 0, 1, 1], [], []>} : vector<8x32xbf16>, vector<32x128xbf16>, vector<8x128xf32> -> vector<8x128xf32>
    %c0_18 = arith.constant 0 : index
    %c0_19 = arith.constant 0 : index
    %21 = vector.load %arg11[%c0_18, %c0_19] : memref<1x128xf32, #tpu.memory_space<vmem>>, vector<1x128xf32>
    %22 = vector.broadcast %21 : vector<1x128xf32> to vector<8x128xf32>
    %23 = arith.addf %20, %22 : vector<8x128xf32>
    %cst_20 = arith.constant dense<0xFF800000> : vector<8xf32>
    %24 = vector.multi_reduction <maximumf>, %23, %cst_20 [1] : vector<8x128xf32> to vector<8xf32>
    %25 = vector.shape_cast %24 : vector<8xf32> to vector<8x1xf32>
    %26 = vector.broadcast %25 : vector<8x1xf32> to vector<8x128xf32>
    %27 = arith.subf %23, %26 : vector<8x128xf32>
    %28 = math.exp %27 : vector<8x128xf32>
    %cst_21 = arith.constant dense<0.000000e+00> : vector<8xf32>
    %29 = vector.multi_reduction <add>, %28, %cst_21 [1] : vector<8x128xf32> to vector<8xf32>
    %30 = vector.shape_cast %29 : vector<8xf32> to vector<8x1xf32>
    %31 = tpu.reciprocal %30 {approx = true} : vector<8x1xf32> -> vector<8x1xf32>
    %32 = vector.broadcast %31 : vector<8x1xf32> to vector<8x128xf32>
    %33 = arith.mulf %28, %32 : vector<8x128xf32>
    %c0_22 = arith.constant 0 : index
    %c0_23 = arith.constant 0 : index
    %34 = vector.load %arg12[%c0_22, %c0_23] : memref<1x32xf32, #tpu.memory_space<vmem>>, vector<1x32xf32>
    %35 = vector.broadcast %34 : vector<1x32xf32> to vector<8x32xf32>
    %36 = arith.mulf %0, %35 : vector<8x32xf32>
    %cst_24 = arith.constant dense<0.000000e+00> : vector<8xf32>
    %37 = vector.multi_reduction <add>, %36, %cst_24 [1] : vector<8x32xf32> to vector<8xf32>
    %38 = vector.shape_cast %37 : vector<8xf32> to vector<8x1xf32>
    %c0_25 = arith.constant 0 : index
    %c0_26 = arith.constant 0 : index
    %39 = vector.load %arg13[%c0_25, %c0_26] : memref<1x32xf32, #tpu.memory_space<vmem>>, vector<1x32xf32>
    %40 = vector.broadcast %39 : vector<1x32xf32> to vector<8x32xf32>
    %41 = arith.mulf %1, %40 : vector<8x32xf32>
    %cst_27 = arith.constant dense<0.000000e+00> : vector<8xf32>
    %42 = vector.multi_reduction <add>, %41, %cst_27 [1] : vector<8x32xf32> to vector<8xf32>
    %43 = vector.shape_cast %42 : vector<8xf32> to vector<8x1xf32>
    %44 = arith.addf %38, %43 : vector<8x1xf32>
    %c0_28 = arith.constant 0 : index
    %c0_29 = arith.constant 0 : index
    %45 = vector.load %arg14[%c0_28, %c0_29] : memref<1x16xf32, #tpu.memory_space<vmem>>, vector<1x16xf32>
    %46 = vector.broadcast %45 : vector<1x16xf32> to vector<8x16xf32>
    %47 = arith.mulf %2, %46 : vector<8x16xf32>
    %cst_30 = arith.constant dense<0.000000e+00> : vector<8xf32>
    %48 = vector.multi_reduction <add>, %47, %cst_30 [1] : vector<8x16xf32> to vector<8xf32>
    %49 = vector.shape_cast %48 : vector<8xf32> to vector<8x1xf32>
    %50 = arith.addf %44, %49 : vector<8x1xf32>
    %c0_31 = arith.constant 0 : index
    %c0_32 = arith.constant 0 : index
    %51 = memref.load %arg15[%c0_31, %c0_32] : memref<1x1xf32, #tpu.memory_space<smem>>
    %52 = vector.broadcast %51 : f32 to vector<8x1xf32>
    %53 = arith.addf %50, %52 : vector<8x1xf32>
    %54 = arith.negf %53 : vector<8x1xf32>
    %55 = math.exp %54 : vector<8x1xf32>
    %cst_33 = arith.constant 1.000000e+00 : f32
    %56 = vector.broadcast %cst_33 : f32 to vector<8x1xf32>
    %57 = arith.addf %56, %55 : vector<8x1xf32>
    %58 = arith.divf %56, %57 : vector<8x1xf32>
    %cst_34 = arith.constant 1.000000e-03 : f32
    %cst_35 = arith.constant 9.990000e-01 : f32
    %59 = vector.broadcast %cst_34 : f32 to vector<8x1xf32>
    %60 = arith.maximumf %59, %58 : vector<8x1xf32>
    %61 = vector.broadcast %cst_35 : f32 to vector<8x1xf32>
    %62 = arith.minimumf %61, %60 : vector<8x1xf32>
    %cst_36 = arith.constant 1.000000e+00 : f32
    %63 = vector.broadcast %cst_36 : f32 to vector<8x1xf32>
    %64 = arith.subf %63, %62 : vector<8x1xf32>
    %c0_37 = arith.constant 0 : index
    %c0_38 = arith.constant 0 : index
    %65 = vector.load %arg17[%c0_37, %c0_38] : memref<8x1xf32, #tpu.memory_space<vmem>>, vector<8x1xf32>
    tpu.vector_store %arg17[%c0_37, %c0_38], %64 {strides = array<i32>} : memref<8x1xf32, #tpu.memory_space<vmem>>, vector<8x1xf32>,
    %c0_39 = arith.constant 0 : index
    %c0_40 = arith.constant 0 : index
    %66 = vector.load %arg4[%c0_39, %c0_40] : memref<8x8xi32, #tpu.memory_space<vmem>>, vector<8x8xi32>
    %c0_41 = arith.constant 0 : index
    %c0_42 = arith.constant 0 : index
    %67 = vector.load %arg5[%c0_41, %c0_42] : memref<8x8xf32, #tpu.memory_space<vmem>>, vector<8x8xf32>
    %68 = vector.broadcast %64 : vector<8x1xf32> to vector<8x8xf32>
    %69 = arith.mulf %68, %67 : vector<8x8xf32>
    %70 = tpu.iota {dimensions = array<i32: 1>} : vector<1x128xi32>
    %c0_i32 = arith.constant 0 : i32
    %71 = vector.broadcast %c0_i32 : i32 to vector<1x128xi32>
    %72 = arith.addi %70, %71 : vector<1x128xi32>
    %73 = vector.broadcast %62 : vector<8x1xf32> to vector<8x128xf32>
    %74 = arith.mulf %73, %33 : vector<8x128xf32>
    %75 = vector.extract_strided_slice %66 {offsets = [0, 0], sizes = [8, 1], strides = [1, 1]} : vector<8x8xi32> to vector<8x1xi32>
    %76 = vector.broadcast %75 : vector<8x1xi32> to vector<8x128xi32>
    %77 = vector.broadcast %72 : vector<1x128xi32> to vector<8x128xi32>
    %78 = arith.cmpi eq, %76, %77 : vector<8x128xi32>
    %79 = vector.extract_strided_slice %69 {offsets = [0, 0], sizes = [8, 1], strides = [1, 1]} : vector<8x8xf32> to vector<8x1xf32>
    %cst_43 = arith.constant 0.000000e+00 : f32
    %80 = vector.shape_cast %79 : vector<8x1xf32> to vector<8x1xf32>
    %81 = vector.broadcast %80 : vector<8x1xf32> to vector<8x128xf32>
    %82 = vector.broadcast %cst_43 : f32 to vector<8x128xf32>
    %83 = arith.select %78, %81, %82 : vector<8x128xi1>, vector<8x128xf32>
    %84 = arith.addf %74, %83 : vector<8x128xf32>
    %85 = vector.extract_strided_slice %66 {offsets = [0, 1], sizes = [8, 1], strides = [1, 1]} : vector<8x8xi32> to vector<8x1xi32>
    %86 = vector.broadcast %85 : vector<8x1xi32> to vector<8x128xi32>
    %87 = vector.broadcast %72 : vector<1x128xi32> to vector<8x128xi32>
    %88 = arith.cmpi eq, %86, %87 : vector<8x128xi32>
    %89 = vector.extract_strided_slice %69 {offsets = [0, 1], sizes = [8, 1], strides = [1, 1]} : vector<8x8xf32> to vector<8x1xf32>
    %cst_44 = arith.constant 0.000000e+00 : f32
    %90 = vector.shape_cast %89 : vector<8x1xf32> to vector<8x1xf32>
    %91 = vector.broadcast %90 : vector<8x1xf32> to vector<8x128xf32>
    %92 = vector.broadcast %cst_44 : f32 to vector<8x128xf32>
    %93 = arith.select %88, %91, %92 : vector<8x128xi1>, vector<8x128xf32>
    %94 = arith.addf %84, %93 : vector<8x128xf32>
    %95 = vector.extract_strided_slice %66 {offsets = [0, 2], sizes = [8, 1], strides = [1, 1]} : vector<8x8xi32> to vector<8x1xi32>
    %96 = vector.broadcast %95 : vector<8x1xi32> to vector<8x128xi32>
    %97 = vector.broadcast %72 : vector<1x128xi32> to vector<8x128xi32>
    %98 = arith.cmpi eq, %96, %97 : vector<8x128xi32>
    %99 = vector.extract_strided_slice %69 {offsets = [0, 2], sizes = [8, 1], strides = [1, 1]} : vector<8x8xf32> to vector<8x1xf32>
    %cst_45 = arith.constant 0.000000e+00 : f32
    %100 = vector.shape_cast %99 : vector<8x1xf32> to vector<8x1xf32>
    %101 = vector.broadcast %100 : vector<8x1xf32> to vector<8x128xf32>
    %102 = vector.broadcast %cst_45 : f32 to vector<8x128xf32>
    %103 = arith.select %98, %101, %102 : vector<8x128xi1>, vector<8x128xf32>
    %104 = arith.addf %94, %103 : vector<8x128xf32>
    %105 = vector.extract_strided_slice %66 {offsets = [0, 3], sizes = [8, 1], strides = [1, 1]} : vector<8x8xi32> to vector<8x1xi32>
    %106 = vector.broadcast %105 : vector<8x1xi32> to vector<8x128xi32>
    %107 = vector.broadcast %72 : vector<1x128xi32> to vector<8x128xi32>
    %108 = arith.cmpi eq, %106, %107 : vector<8x128xi32>
    %109 = vector.extract_strided_slice %69 {offsets = [0, 3], sizes = [8, 1], strides = [1, 1]} : vector<8x8xf32> to vector<8x1xf32>
    %cst_46 = arith.constant 0.000000e+00 : f32
    %110 = vector.shape_cast %109 : vector<8x1xf32> to vector<8x1xf32>
    %111 = vector.broadcast %110 : vector<8x1xf32> to vector<8x128xf32>
    %112 = vector.broadcast %cst_46 : f32 to vector<8x128xf32>
    %113 = arith.select %108, %111, %112 : vector<8x128xi1>, vector<8x128xf32>
    %114 = arith.addf %104, %113 : vector<8x128xf32>
    %115 = vector.extract_strided_slice %66 {offsets = [0, 4], sizes = [8, 1], strides = [1, 1]} : vector<8x8xi32> to vector<8x1xi32>
    %116 = vector.broadcast %115 : vector<8x1xi32> to vector<8x128xi32>
    %117 = vector.broadcast %72 : vector<1x128xi32> to vector<8x128xi32>
    %118 = arith.cmpi eq, %116, %117 : vector<8x128xi32>
    %119 = vector.extract_strided_slice %69 {offsets = [0, 4], sizes = [8, 1], strides = [1, 1]} : vector<8x8xf32> to vector<8x1xf32>
    %cst_47 = arith.constant 0.000000e+00 : f32
    %120 = vector.shape_cast %119 : vector<8x1xf32> to vector<8x1xf32>
    %121 = vector.broadcast %120 : vector<8x1xf32> to vector<8x128xf32>
    %122 = vector.broadcast %cst_47 : f32 to vector<8x128xf32>
    %123 = arith.select %118, %121, %122 : vector<8x128xi1>, vector<8x128xf32>
    %124 = arith.addf %114, %123 : vector<8x128xf32>
    %125 = vector.extract_strided_slice %66 {offsets = [0, 5], sizes = [8, 1], strides = [1, 1]} : vector<8x8xi32> to vector<8x1xi32>
    %126 = vector.broadcast %125 : vector<8x1xi32> to vector<8x128xi32>
    %127 = vector.broadcast %72 : vector<1x128xi32> to vector<8x128xi32>
    %128 = arith.cmpi eq, %126, %127 : vector<8x128xi32>
    %129 = vector.extract_strided_slice %69 {offsets = [0, 5], sizes = [8, 1], strides = [1, 1]} : vector<8x8xf32> to vector<8x1xf32>
    %cst_48 = arith.constant 0.000000e+00 : f32
    %130 = vector.shape_cast %129 : vector<8x1xf32> to vector<8x1xf32>
    %131 = vector.broadcast %130 : vector<8x1xf32> to vector<8x128xf32>
    %132 = vector.broadcast %cst_48 : f32 to vector<8x128xf32>
    %133 = arith.select %128, %131, %132 : vector<8x128xi1>, vector<8x128xf32>
    %134 = arith.addf %124, %133 : vector<8x128xf32>
    %135 = vector.extract_strided_slice %66 {offsets = [0, 6], sizes = [8, 1], strides = [1, 1]} : vector<8x8xi32> to vector<8x1xi32>
    %136 = vector.broadcast %135 : vector<8x1xi32> to vector<8x128xi32>
    %137 = vector.broadcast %72 : vector<1x128xi32> to vector<8x128xi32>
    %138 = arith.cmpi eq, %136, %137 : vector<8x128xi32>
    %139 = vector.extract_strided_slice %69 {offsets = [0, 6], sizes = [8, 1], strides = [1, 1]} : vector<8x8xf32> to vector<8x1xf32>
    %cst_49 = arith.constant 0.000000e+00 : f32
    %140 = vector.shape_cast %139 : vector<8x1xf32> to vector<8x1xf32>
    %141 = vector.broadcast %140 : vector<8x1xf32> to vector<8x128xf32>
    %142 = vector.broadcast %cst_49 : f32 to vector<8x128xf32>
    %143 = arith.select %138, %141, %142 : vector<8x128xi1>, vector<8x128xf32>
    %144 = arith.addf %134, %143 : vector<8x128xf32>
    %145 = vector.extract_strided_slice %66 {offsets = [0, 7], sizes = [8, 1], strides = [1, 1]} : vector<8x8xi32> to vector<8x1xi32>
    %146 = vector.broadcast %145 : vector<8x1xi32> to vector<8x128xi32>
    %147 = vector.broadcast %72 : vector<1x128xi32> to vector<8x128xi32>
    %148 = arith.cmpi eq, %146, %147 : vector<8x128xi32>
    %149 = vector.extract_strided_slice %69 {offsets = [0, 7], sizes = [8, 1], strides = [1, 1]} : vector<8x8xf32> to vector<8x1xf32>
    %cst_50 = arith.constant 0.000000e+00 : f32
    %150 = vector.shape_cast %149 : vector<8x1xf32> to vector<8x1xf32>
    %151 = vector.broadcast %150 : vector<8x1xf32> to vector<8x128xf32>
    %152 = vector.broadcast %cst_50 : f32 to vector<8x128xf32>
    %153 = arith.select %148, %151, %152 : vector<8x128xi1>, vector<8x128xf32>
    %154 = arith.addf %144, %153 : vector<8x128xf32>
    %c0_51 = arith.constant 0 : index
    %c0_52 = arith.constant 0 : index
    %155 = vector.load %arg16[%c0_51, %c0_52] : memref<8x128xf32, #tpu.memory_space<vmem>>, vector<8x128xf32>
    tpu.vector_store %arg16[%c0_51, %c0_52], %154 {strides = array<i32>} : memref<8x128xf32, #tpu.memory_space<vmem>>, vector<8x128xf32>,
    return
  }
  func.func @transform_0(%arg0: i32) -> (i32, i32) {
    %c0_i32 = arith.constant 0 : i32
    %c0_i32_0 = arith.constant 0 : i32
    return %arg0, %c0_i32 : i32, i32
  }
  func.func @transform_1(%arg0: i32) -> (i32, i32) {
    %c0_i32 = arith.constant 0 : i32
    %c0_i32_0 = arith.constant 0 : i32
    return %arg0, %c0_i32 : i32, i32
  }
  func.func @transform_2(%arg0: i32) -> (i32, i32) {
    %c0_i32 = arith.constant 0 : i32
    %c0_i32_0 = arith.constant 0 : i32
    return %arg0, %c0_i32 : i32, i32
  }
  func.func @transform_3(%arg0: i32) -> (i32, i32) {
    %c0_i32 = arith.constant 0 : i32
    %c0_i32_0 = arith.constant 0 : i32
    return %arg0, %c0_i32 : i32, i32
  }
  func.func @transform_4(%arg0: i32) -> (i32, i32) {
    %c0_i32 = arith.constant 0 : i32
    %c0_i32_0 = arith.constant 0 : i32
    return %arg0, %c0_i32 : i32, i32
  }
  func.func @transform_5(%arg0: i32) -> (i32, i32) {
    %c0_i32 = arith.constant 0 : i32
    %c0_i32_0 = arith.constant 0 : i32
    %c0_i32_1 = arith.constant 0 : i32
    return %c0_i32, %c0_i32_0 : i32, i32
  }
  func.func @transform_6(%arg0: i32) -> (i32, i32) {
    %c0_i32 = arith.constant 0 : i32
    %c0_i32_0 = arith.constant 0 : i32
    %c0_i32_1 = arith.constant 0 : i32
    return %c0_i32, %c0_i32_0 : i32, i32
  }
  func.func @transform_7(%arg0: i32) -> (i32, i32) {
    %c0_i32 = arith.constant 0 : i32
    %c0_i32_0 = arith.constant 0 : i32
    %c0_i32_1 = arith.constant 0 : i32
    return %c0_i32, %c0_i32_0 : i32, i32
  }
  func.func @transform_8(%arg0: i32) -> (i32, i32) {
    %c0_i32 = arith.constant 0 : i32
    %c0_i32_0 = arith.constant 0 : i32
    %c0_i32_1 = arith.constant 0 : i32
    return %c0_i32, %c0_i32_0 : i32, i32
  }
  func.func @transform_9(%arg0: i32) -> (i32, i32) {
    %c0_i32 = arith.constant 0 : i32
    %c0_i32_0 = arith.constant 0 : i32
    %c0_i32_1 = arith.constant 0 : i32
    return %c0_i32, %c0_i32_0 : i32, i32
  }
  func.func @transform_10(%arg0: i32) -> (i32, i32) {
    %c0_i32 = arith.constant 0 : i32
    %c0_i32_0 = arith.constant 0 : i32
    %c0_i32_1 = arith.constant 0 : i32
    return %c0_i32, %c0_i32_0 : i32, i32
  }
  func.func @transform_11(%arg0: i32) -> (i32, i32) {
    %c0_i32 = arith.constant 0 : i32
    %c0_i32_0 = arith.constant 0 : i32
    %c0_i32_1 = arith.constant 0 : i32
    return %c0_i32, %c0_i32_0 : i32, i32
  }
  func.func @transform_12(%arg0: i32) -> (i32, i32) {
    %c0_i32 = arith.constant 0 : i32
    %c0_i32_0 = arith.constant 0 : i32
    %c0_i32_1 = arith.constant 0 : i32
    return %c0_i32, %c0_i32_0 : i32, i32
  }
  func.func @transform_13(%arg0: i32) -> (i32, i32) {
    %c0_i32 = arith.constant 0 : i32
    %c0_i32_0 = arith.constant 0 : i32
    %c0_i32_1 = arith.constant 0 : i32
    return %c0_i32, %c0_i32_0 : i32, i32
  }
  func.func @transform_14(%arg0: i32) -> (i32, i32) {
    %c0_i32 = arith.constant 0 : i32
    %c0_i32_0 = arith.constant 0 : i32
    %c0_i32_1 = arith.constant 0 : i32
    return %c0_i32, %c0_i32_0 : i32, i32
  }
  func.func @transform_15(%arg0: i32) -> (i32, i32) {
    %c0_i32 = arith.constant 0 : i32
    %c0_i32_0 = arith.constant 0 : i32
    return %arg0, %c0_i32 : i32, i32
  }
  func.func @transform_16(%arg0: i32) -> (i32, i32) {
    %c0_i32 = arith.constant 0 : i32
    %c0_i32_0 = arith.constant 0 : i32
    return %arg0, %c0_i32 : i32, i32
  }
}

</mosaic_0001>

<llo_original>
// kernel: tpu_custom_call.1
$region0: #{tpu_custom_call.1}
  #allocation0 [shape = 'u32[]', space=smem, size = 0x4, offset = 0x4, fixed_abs, tag = 'smem constant byte address 0x4 - core index']
  #allocation1 [shape = 'u32[144,128]{1,0:T(1,128)}', space=vmem, size = 0x12000, scoped, tag = 'internal scratch']
  #allocation2 [shape = 'f32[1,1]{1,0:T(1,128)S(6)}', space=smem, size = 0x200, scoped, tag = 'scoped memory for tpu_custom_call.1']
  %s0 = inlined_call_operand.hbm [shape: f32[16,32], index: 0, kind: input, shape index: {}]
  %s1 = inlined_call_operand.hbm [shape: f32[16,32], index: 1, kind: input, shape index: {}]
  %s2 = inlined_call_operand.hbm [shape: f32[16,16], index: 2, kind: input, shape index: {}]
  %s3 = inlined_call_operand.hbm [shape: s32[16,8], index: 3, kind: input, shape index: {}]
  %s4 = inlined_call_operand.hbm [shape: f32[16,8], index: 4, kind: input, shape index: {}]
  %s5 = inlined_call_operand.hbm [shape: bf16[32,32], index: 5, kind: input, shape index: {}]
  %s6 = inlined_call_operand.hbm [shape: bf16[32,32], index: 6, kind: input, shape index: {}]
  %s7 = inlined_call_operand.hbm [shape: bf16[16,32], index: 7, kind: input, shape index: {}]
  %s8 = inlined_call_operand.hbm [shape: f32[1,32], index: 8, kind: input, shape index: {}]
  %s9 = inlined_call_operand.hbm [shape: bf16[32,128], index: 9, kind: input, shape index: {}]
  %s10 = inlined_call_operand.hbm [shape: f32[1,128], index: 10, kind: input, shape index: {}]
  %s11 = inlined_call_operand.hbm [shape: f32[1,32], index: 11, kind: input, shape index: {}]
  %s12 = inlined_call_operand.hbm [shape: f32[1,32], index: 12, kind: input, shape index: {}]
  %s13 = inlined_call_operand.hbm [shape: f32[1,16], index: 13, kind: input, shape index: {}]
  %s14 = inlined_call_operand.<no memory space> [shape: f32[1,1], index: 14, kind: input, shape index: {}]
  %s15 = inlined_call_operand.hbm [shape: f32[16,128], index: 15, kind: output, shape index: {0}]
  %s16 = inlined_call_operand.hbm [shape: f32[16,1], index: 16, kind: output, shape index: {1}]
  %17 = xla_tuple %s15, %s16
  %s18 = sld [smem:[#allocation0]]
  $region157: #{tpu_custom_call.1} parent=0
    _
  %s20 = ssub.s32 1, %s18
  %s21 = scalar_select 0, %s20, %s18
  %22 = sst [smem:[#allocation2]] %s14
  $region1: #{tpu_custom_call.1} parent=0
    #allocation3 [shape = 'u8[8192]{0}', space=vmem, size = 0x2000, scoped, tag = 'input window, operand 0']
    #allocation4 [shape = 's32[2]{0}', space=sflag, size = 0x8, scoped, tag = 'scoped memory for tpu_custom_call.1']
    #allocation5 [shape = 's32[2]{0}', space=sflag, size = 0x8, scoped, tag = 'scoped memory for tpu_custom_call.1']
    #allocation6 [shape = 'u8[8192]{0}', space=vmem, size = 0x2000, scoped, tag = 'input window, operand 1']
    #allocation7 [shape = 's32[2]{0}', space=sflag, size = 0x8, scoped, tag = 'scoped memory for tpu_custom_call.1']
    #allocation8 [shape = 'u8[8192]{0}', space=vmem, size = 0x2000, scoped, tag = 'input window, operand 2']
    #allocation9 [shape = 'u8[8192]{0}', space=vmem, size = 0x2000, scoped, tag = 'input window, operand 3']
    #allocation10 [shape = 's32[2]{0}', space=sflag, size = 0x8, scoped, tag = 'scoped memory for tpu_custom_call.1']
    #allocation11 [shape = 'u8[8192]{0}', space=vmem, size = 0x2000, scoped, tag = 'input window, operand 4']
    #allocation12 [shape = 'u8[8192]{0}', space=vmem, size = 0x2000, scoped, tag = 'input window, operand 5, single buffered']
    #allocation13 [shape = 's32[1]{0}', space=sflag, size = 0x4, scoped, tag = 'scoped memory for tpu_custom_call.1']
    #allocation14 [shape = 'u8[8192]{0}', space=vmem, size = 0x2000, scoped, tag = 'input window, operand 6, single buffered']
    #allocation15 [shape = 'u8[4096]{0}', space=vmem, size = 0x1000, scoped, tag = 'input window, operand 7, single buffered']
    #allocation16 [shape = 's32[1]{0}', space=sflag, size = 0x4, scoped, tag = 'scoped memory for tpu_custom_call.1']
    #allocation17 [shape = 'u8[512]{0}', space=vmem, size = 0x400, scoped, tag = 'input window, operand 8, single buffered']
    #allocation18 [shape = 'u8[8192]{0}', space=vmem, size = 0x2000, scoped, tag = 'input window, operand 9, single buffered']
    #allocation19 [shape = 's32[1]{0}', space=sflag, size = 0x4, scoped, tag = 'scoped memory for tpu_custom_call.1']
    #allocation20 [shape = 'u8[512]{0}', space=vmem, size = 0x400, scoped, tag = 'input window, operand 10, single buffered']
    #allocation21 [shape = 'u8[512]{0}', space=vmem, size = 0x400, scoped, tag = 'input window, operand 11, single buffered']
    #allocation22 [shape = 's32[1]{0}', space=sflag, size = 0x4, scoped, tag = 'scoped memory for tpu_custom_call.1']
    #allocation23 [shape = 'u8[512]{0}', space=vmem, size = 0x400, scoped, tag = 'input window, operand 12, single buffered']
    #allocation24 [shape = 'u8[512]{0}', space=vmem, size = 0x400, scoped, tag = 'input window, operand 13, single buffered']
    #allocation25 [shape = 's32[1]{0}', space=sflag, size = 0x4, scoped, tag = 'scoped memory for tpu_custom_call.1']
    #allocation26 [shape = 'u8[8192]{0}', space=vmem, size = 0x2000, scoped, tag = 'output window, operand 0']
    #allocation27 [shape = 'u8[8192]{0}', space=vmem, size = 0x2000, scoped, tag = 'output window, operand 1']
    #allocation28 [shape = 's32[2]{0}', space=sflag, size = 0x8, scoped, tag = 'scoped memory for tpu_custom_call.1']
    %23 = vsyncpa [#allocation4], 0
    %s24 = scalar_lea.sflag [#allocation4], 1
    %25 = vsyncpa %s24, 0
    %26 = vsyncpa [#allocation7], 0
    %s27 = scalar_lea.sflag [#allocation7], 1
    %28 = vsyncpa %s27, 0
    %29 = vsyncpa [#allocation10], 0
    %s30 = scalar_lea.sflag [#allocation10], 1
    %31 = vsyncpa %s30, 0
    %32 = vsyncpa [#allocation13], 0
    %33 = vsyncpa [#allocation16], 0
    %34 = vsyncpa [#allocation19], 0
    %35 = vsyncpa [#allocation22], 0
    %36 = vsyncpa [#allocation25], 0
    %37 = vsyncpa [#allocation5], 0
    %s38 = scalar_lea.sflag [#allocation5], 1
    %39 = vsyncpa %s38, 0
    %40 = vsyncpa [#allocation28], 0
    %s41 = scalar_lea.sflag [#allocation28], 1
    %42 = vsyncpa %s41, 0
    loop: start=0, step=1, limit=4
    $region2: #{tpu_custom_call.1} parent=1 // loop_pre_header
      _
    $region3: #{tpu_custom_call.1} parent=1 // loop_header
      %s44 = sphi 0, %s48
      %p45 = scmp.ge.s32.totalorder %s44, 4
      %s54 = sphi 0, %s56
      %s57 = sphi 0, %s54
      %s58 = sphi 0, %s57
      %s74 = sphi 0, %s58
      %s80 = sphi 0, %s82
      %s83 = sphi 0, %s80
      %s84 = sphi 0, %s83
      %s100 = sphi 0, %s84
      %s106 = sphi 0, %s108
      %s109 = sphi 0, %s106
      %s110 = sphi 0, %s109
      %s126 = sphi 0, %s110
      %s132 = sphi 0, %s134
      %s135 = sphi 0, %s132
      %s136 = sphi 0, %s135
      %s152 = sphi 0, %s136
      %s158 = sphi 0, %s160
      %s161 = sphi 0, %s158
      %s162 = sphi 0, %s161
      %s178 = sphi 0, %s162
      %s182 = sphi 0, %s182
      %s184 = sphi 0, %s182
      %s185 = sphi 0, %s184
      %s199 = sphi 0, %s185
      %s203 = sphi 0, %s203
      %s205 = sphi 0, %s203
      %s206 = sphi 0, %s205
      %s220 = sphi 0, %s206
      %s224 = sphi 0, %s224
      %s226 = sphi 0, %s224
      %s227 = sphi 0, %s226
      %s241 = sphi 0, %s227
      %s245 = sphi 0, %s245
      %s247 = sphi 0, %s245
      %s248 = sphi 0, %s247
      %s262 = sphi 0, %s248
      %s266 = sphi 0, %s266
      %s268 = sphi 0, %s266
      %s269 = sphi 0, %s268
      %s283 = sphi 0, %s269
      %s287 = sphi 0, %s287
      %s289 = sphi 0, %s287
      %s290 = sphi 0, %s289
      %s304 = sphi 0, %s290
      %s308 = sphi 0, %s308
      %s310 = sphi 0, %s308
      %s311 = sphi 0, %s310
      %s325 = sphi 0, %s311
      %s329 = sphi 0, %s329
      %s331 = sphi 0, %s329
      %s332 = sphi 0, %s331
      %s346 = sphi 0, %s332
      %s350 = sphi 0, %s350
      %s352 = sphi 0, %s350
      %s353 = sphi 0, %s352
      %s367 = sphi 0, %s353
      %s371 = sphi 0, %s371
      %s373 = sphi 0, %s371
      %s374 = sphi 0, %s373
      %s388 = sphi 0, %s374
      %s394 = sphi 0, %s396
      %s397 = sphi 0, %s394
      %s398 = sphi 0, %s397
      %s414 = sphi 0, %s398
      %s420 = sphi 0, %s422
      %s423 = sphi 0, %s420
      %s424 = sphi 0, %s423
      %s440 = sphi 0, %s424
    $region4: #{tpu_custom_call.1} parent=1 // loop_header_branch
      %47 = sbr.rel (%p45) target = $region8
    $region5: #{tpu_custom_call.1} parent=1 // loop_body
      %s49 = ssub.s32 %s44, 1
      %s50 = ssub.s32 %s44, 2
      %s51 = sadd.s32 %s44, 1
      %s52 = ssub.s32 %s44, %s51
      %p53 = scmp.eq.s32.totalorder %s52, 0
      %s55 = sadd.s32 %s54, 1
      %s56 = scalar_select %p53, %s54, %s55
      %p59 = pneg %p53
      %p60 = scmp.eq.s32.totalorder %s44, 1
      %p61 = por %p59, %p60
      %p62 = scmp.ne.s32.totalorder %s54, %s57
      %p63 = scmp.eq.s32.totalorder %s44, 0
      %p64 = por %p62, %p63
      %p65 = scmp.ne.s32.totalorder %s54, %s57
      %p66 = scmp.eq.s32.totalorder %s49, 1
      %p67 = por %p65, %p66
      %p68 = scmp.ne.s32.totalorder %s57, %s58
      %p69 = scmp.eq.s32.totalorder %s49, 0
      %p70 = por %p68, %p69
      %p71 = scmp.ne.s32.totalorder %s57, %s58
      %p72 = scmp.eq.s32.totalorder %s50, 1
      %p73 = por %p71, %p72
      %p75 = scmp.ne.s32.totalorder %s58, %s74
      %p76 = scmp.eq.s32.totalorder %s50, 0
      %p77 = por %p75, %p76
      %s78 = ssub.s32 %s44, %s51
      %p79 = scmp.eq.s32.totalorder %s78, 0
      %s81 = sadd.s32 %s80, 1
      %s82 = scalar_select %p79, %s80, %s81
      %p85 = pneg %p79
      %p86 = scmp.eq.s32.totalorder %s44, 1
      %p87 = por %p85, %p86
      %p88 = scmp.ne.s32.totalorder %s80, %s83
      %p89 = scmp.eq.s32.totalorder %s44, 0
      %p90 = por %p88, %p89
      %p91 = scmp.ne.s32.totalorder %s80, %s83
      %p92 = scmp.eq.s32.totalorder %s49, 1
      %p93 = por %p91, %p92
      %p94 = scmp.ne.s32.totalorder %s83, %s84
      %p95 = scmp.eq.s32.totalorder %s49, 0
      %p96 = por %p94, %p95
      %p97 = scmp.ne.s32.totalorder %s83, %s84
      %p98 = scmp.eq.s32.totalorder %s50, 1
      %p99 = por %p97, %p98
      %p101 = scmp.ne.s32.totalorder %s84, %s100
      %p102 = scmp.eq.s32.totalorder %s50, 0
      %p103 = por %p101, %p102
      %s104 = ssub.s32 %s44, %s51
      %p105 = scmp.eq.s32.totalorder %s104, 0
      %s107 = sadd.s32 %s106, 1
      %s108 = scalar_select %p105, %s106, %s107
      %p111 = pneg %p105
      %p112 = scmp.eq.s32.totalorder %s44, 1
      %p113 = por %p111, %p112
      %p114 = scmp.ne.s32.totalorder %s106, %s109
      %p115 = scmp.eq.s32.totalorder %s44, 0
      %p116 = por %p114, %p115
      %p117 = scmp.ne.s32.totalorder %s106, %s109
      %p118 = scmp.eq.s32.totalorder %s49, 1
      %p119 = por %p117, %p118
      %p120 = scmp.ne.s32.totalorder %s109, %s110
      %p121 = scmp.eq.s32.totalorder %s49, 0
      %p122 = por %p120, %p121
      %p123 = scmp.ne.s32.totalorder %s109, %s110
      %p124 = scmp.eq.s32.totalorder %s50, 1
      %p125 = por %p123, %p124
      %p127 = scmp.ne.s32.totalorder %s110, %s126
      %p128 = scmp.eq.s32.totalorder %s50, 0
      %p129 = por %p127, %p128
      %s130 = ssub.s32 %s44, %s51
      %p131 = scmp.eq.s32.totalorder %s130, 0
      %s133 = sadd.s32 %s132, 1
      %s134 = scalar_select %p131, %s132, %s133
      %p137 = pneg %p131
      %p138 = scmp.eq.s32.totalorder %s44, 1
      %p139 = por %p137, %p138
      %p140 = scmp.ne.s32.totalorder %s132, %s135
      %p141 = scmp.eq.s32.totalorder %s44, 0
      %p142 = por %p140, %p141
      %p143 = scmp.ne.s32.totalorder %s132, %s135
      %p144 = scmp.eq.s32.totalorder %s49, 1
      %p145 = por %p143, %p144
      %p146 = scmp.ne.s32.totalorder %s135, %s136
      %p147 = scmp.eq.s32.totalorder %s49, 0
      %p148 = por %p146, %p147
      %p149 = scmp.ne.s32.totalorder %s135, %s136
      %p150 = scmp.eq.s32.totalorder %s50, 1
      %p151 = por %p149, %p150
      %p153 = scmp.ne.s32.totalorder %s136, %s152
      %p154 = scmp.eq.s32.totalorder %s50, 0
      %p155 = por %p153, %p154
      %s156 = ssub.s32 %s44, %s51
      %p157 = scmp.eq.s32.totalorder %s156, 0
      %s159 = sadd.s32 %s158, 1
      %s160 = scalar_select %p157, %s158, %s159
      %p163 = pneg %p157
      %p164 = scmp.eq.s32.totalorder %s44, 1
      %p165 = por %p163, %p164
      %p166 = scmp.ne.s32.totalorder %s158, %s161
      %p167 = scmp.eq.s32.totalorder %s44, 0
      %p168 = por %p166, %p167
      %p169 = scmp.ne.s32.totalorder %s158, %s161
      %p170 = scmp.eq.s32.totalorder %s49, 1
      %p171 = por %p169, %p170
      %p172 = scmp.ne.s32.totalorder %s161, %s162
      %p173 = scmp.eq.s32.totalorder %s49, 0
      %p174 = por %p172, %p173
      %p175 = scmp.ne.s32.totalorder %s161, %s162
      %p176 = scmp.eq.s32.totalorder %s50, 1
      %p177 = por %p175, %p176
      %p179 = scmp.ne.s32.totalorder %s162, %s178
      %p180 = scmp.eq.s32.totalorder %s50, 0
      %p181 = por %p179, %p180
      %s183 = sadd.s32 %s182, 1
      %p186 = scmp.eq.s32.totalorder %s44, 1
      %p187 = scmp.ne.s32.totalorder %s182, %s184
      %p188 = scmp.eq.s32.totalorder %s44, 0
      %p189 = por %p187, %p188
      %p190 = scmp.ne.s32.totalorder %s182, %s184
      %p191 = scmp.eq.s32.totalorder %s49, 1
      %p192 = por %p190, %p191
      %p193 = scmp.ne.s32.totalorder %s184, %s185
      %p194 = scmp.eq.s32.totalorder %s49, 0
      %p195 = por %p193, %p194
      %p196 = scmp.ne.s32.totalorder %s184, %s185
      %p197 = scmp.eq.s32.totalorder %s50, 1
      %p198 = por %p196, %p197
      %p200 = scmp.ne.s32.totalorder %s185, %s199
      %p201 = scmp.eq.s32.totalorder %s50, 0
      %p202 = por %p200, %p201
      %s204 = sadd.s32 %s203, 1
      %p207 = scmp.eq.s32.totalorder %s44, 1
      %p208 = scmp.ne.s32.totalorder %s203, %s205
      %p209 = scmp.eq.s32.totalorder %s44, 0
      %p210 = por %p208, %p209
      %p211 = scmp.ne.s32.totalorder %s203, %s205
      %p212 = scmp.eq.s32.totalorder %s49, 1
      %p213 = por %p211, %p212
      %p214 = scmp.ne.s32.totalorder %s205, %s206
      %p215 = scmp.eq.s32.totalorder %s49, 0
      %p216 = por %p214, %p215
      %p217 = scmp.ne.s32.totalorder %s205, %s206
      %p218 = scmp.eq.s32.totalorder %s50, 1
      %p219 = por %p217, %p218
      %p221 = scmp.ne.s32.totalorder %s206, %s220
      %p222 = scmp.eq.s32.totalorder %s50, 0
      %p223 = por %p221, %p222
      %s225 = sadd.s32 %s224, 1
      %p228 = scmp.eq.s32.totalorder %s44, 1
      %p229 = scmp.ne.s32.totalorder %s224, %s226
      %p230 = scmp.eq.s32.totalorder %s44, 0
      %p231 = por %p229, %p230
      %p232 = scmp.ne.s32.totalorder %s224, %s226
      %p233 = scmp.eq.s32.totalorder %s49, 1
      %p234 = por %p232, %p233
      %p235 = scmp.ne.s32.totalorder %s226, %s227
      %p236 = scmp.eq.s32.totalorder %s49, 0
      %p237 = por %p235, %p236
      %p238 = scmp.ne.s32.totalorder %s226, %s227
      %p239 = scmp.eq.s32.totalorder %s50, 1
      %p240 = por %p238, %p239
      %p242 = scmp.ne.s32.totalorder %s227, %s241
      %p243 = scmp.eq.s32.totalorder %s50, 0
      %p244 = por %p242, %p243
      %s246 = sadd.s32 %s245, 1
      %p249 = scmp.eq.s32.totalorder %s44, 1
      %p250 = scmp.ne.s32.totalorder %s245, %s247
      %p251 = scmp.eq.s32.totalorder %s44, 0
      %p252 = por %p250, %p251
      %p253 = scmp.ne.s32.totalorder %s245, %s247
      %p254 = scmp.eq.s32.totalorder %s49, 1
      %p255 = por %p253, %p254
      %p256 = scmp.ne.s32.totalorder %s247, %s248
      %p257 = scmp.eq.s32.totalorder %s49, 0
      %p258 = por %p256, %p257
      %p259 = scmp.ne.s32.totalorder %s247, %s248
      %p260 = scmp.eq.s32.totalorder %s50, 1
      %p261 = por %p259, %p260
      %p263 = scmp.ne.s32.totalorder %s248, %s262
      %p264 = scmp.eq.s32.totalorder %s50, 0
      %p265 = por %p263, %p264
      %s267 = sadd.s32 %s266, 1
      %p270 = scmp.eq.s32.totalorder %s44, 1
      %p271 = scmp.ne.s32.totalorder %s266, %s268
      %p272 = scmp.eq.s32.totalorder %s44, 0
      %p273 = por %p271, %p272
      %p274 = scmp.ne.s32.totalorder %s266, %s268
      %p275 = scmp.eq.s32.totalorder %s49, 1
      %p276 = por %p274, %p275
      %p277 = scmp.ne.s32.totalorder %s268, %s269
      %p278 = scmp.eq.s32.totalorder %s49, 0
      %p279 = por %p277, %p278
      %p280 = scmp.ne.s32.totalorder %s268, %s269
      %p281 = scmp.eq.s32.totalorder %s50, 1
      %p282 = por %p280, %p281
      %p284 = scmp.ne.s32.totalorder %s269, %s283
      %p285 = scmp.eq.s32.totalorder %s50, 0
      %p286 = por %p284, %p285
      %s288 = sadd.s32 %s287, 1
      %p291 = scmp.eq.s32.totalorder %s44, 1
      %p292 = scmp.ne.s32.totalorder %s287, %s289
      %p293 = scmp.eq.s32.totalorder %s44, 0
      %p294 = por %p292, %p293
      %p295 = scmp.ne.s32.totalorder %s287, %s289
      %p296 = scmp.eq.s32.totalorder %s49, 1
      %p297 = por %p295, %p296
      %p298 = scmp.ne.s32.totalorder %s289, %s290
      %p299 = scmp.eq.s32.totalorder %s49, 0
      %p300 = por %p298, %p299
      %p301 = scmp.ne.s32.totalorder %s289, %s290
      %p302 = scmp.eq.s32.totalorder %s50, 1
      %p303 = por %p301, %p302
      %p305 = scmp.ne.s32.totalorder %s290, %s304
      %p306 = scmp.eq.s32.totalorder %s50, 0
      %p307 = por %p305, %p306
      %s309 = sadd.s32 %s308, 1
      %p312 = scmp.eq.s32.totalorder %s44, 1
      %p313 = scmp.ne.s32.totalorder %s308, %s310
      %p314 = scmp.eq.s32.totalorder %s44, 0
      %p315 = por %p313, %p314
      %p316 = scmp.ne.s32.totalorder %s308, %s310
      %p317 = scmp.eq.s32.totalorder %s49, 1
      %p318 = por %p316, %p317
      %p319 = scmp.ne.s32.totalorder %s310, %s311
      %p320 = scmp.eq.s32.totalorder %s49, 0
      %p321 = por %p319, %p320
      %p322 = scmp.ne.s32.totalorder %s310, %s311
      %p323 = scmp.eq.s32.totalorder %s50, 1
      %p324 = por %p322, %p323
      %p326 = scmp.ne.s32.totalorder %s311, %s325
      %p327 = scmp.eq.s32.totalorder %s50, 0
      %p328 = por %p326, %p327
      %s330 = sadd.s32 %s329, 1
      %p333 = scmp.eq.s32.totalorder %s44, 1
      %p334 = scmp.ne.s32.totalorder %s329, %s331
      %p335 = scmp.eq.s32.totalorder %s44, 0
      %p336 = por %p334, %p335
      %p337 = scmp.ne.s32.totalorder %s329, %s331
      %p338 = scmp.eq.s32.totalorder %s49, 1
      %p339 = por %p337, %p338
      %p340 = scmp.ne.s32.totalorder %s331, %s332
      %p341 = scmp.eq.s32.totalorder %s49, 0
      %p342 = por %p340, %p341
      %p343 = scmp.ne.s32.totalorder %s331, %s332
      %p344 = scmp.eq.s32.totalorder %s50, 1
      %p345 = por %p343, %p344
      %p347 = scmp.ne.s32.totalorder %s332, %s346
      %p348 = scmp.eq.s32.totalorder %s50, 0
      %p349 = por %p347, %p348
      %s351 = sadd.s32 %s350, 1
      %p354 = scmp.eq.s32.totalorder %s44, 1
      %p355 = scmp.ne.s32.totalorder %s350, %s352
      %p356 = scmp.eq.s32.totalorder %s44, 0
      %p357 = por %p355, %p356
      %p358 = scmp.ne.s32.totalorder %s350, %s352
      %p359 = scmp.eq.s32.totalorder %s49, 1
      %p360 = por %p358, %p359
      %p361 = scmp.ne.s32.totalorder %s352, %s353
      %p362 = scmp.eq.s32.totalorder %s49, 0
      %p363 = por %p361, %p362
      %p364 = scmp.ne.s32.totalorder %s352, %s353
      %p365 = scmp.eq.s32.totalorder %s50, 1
      %p366 = por %p364, %p365
      %p368 = scmp.ne.s32.totalorder %s353, %s367
      %p369 = scmp.eq.s32.totalorder %s50, 0
      %p370 = por %p368, %p369
      %s372 = sadd.s32 %s371, 1
      %p375 = scmp.eq.s32.totalorder %s44, 1
      %p376 = scmp.ne.s32.totalorder %s371, %s373
      %p377 = scmp.eq.s32.totalorder %s44, 0
      %p378 = por %p376, %p377
      %p379 = scmp.ne.s32.totalorder %s371, %s373
      %p380 = scmp.eq.s32.totalorder %s49, 1
      %p381 = por %p379, %p380
      %p382 = scmp.ne.s32.totalorder %s373, %s374
      %p383 = scmp.eq.s32.totalorder %s49, 0
      %p384 = por %p382, %p383
      %p385 = scmp.ne.s32.totalorder %s373, %s374
      %p386 = scmp.eq.s32.totalorder %s50, 1
      %p387 = por %p385, %p386
      %p389 = scmp.ne.s32.totalorder %s374, %s388
      %p390 = scmp.eq.s32.totalorder %s50, 0
      %p391 = por %p389, %p390
      %s392 = ssub.s32 %s44, %s51
      %p393 = scmp.eq.s32.totalorder %s392, 0
      %s395 = sadd.s32 %s394, 1
      %s396 = scalar_select %p393, %s394, %s395
      %p399 = pneg %p393
      %p400 = scmp.eq.s32.totalorder %s44, 1
      %p401 = por %p399, %p400
      %p402 = scmp.ne.s32.totalorder %s394, %s397
      %p403 = scmp.eq.s32.totalorder %s44, 0
      %p404 = por %p402, %p403
      %p405 = scmp.ne.s32.totalorder %s394, %s397
      %p406 = scmp.eq.s32.totalorder %s49, 1
      %p407 = por %p405, %p406
      %p408 = scmp.ne.s32.totalorder %s397, %s398
      %p409 = scmp.eq.s32.totalorder %s49, 0
      %p410 = por %p408, %p409
      %p411 = scmp.ne.s32.totalorder %s397, %s398
      %p412 = scmp.eq.s32.totalorder %s50, 1
      %p413 = por %p411, %p412
      %p415 = scmp.ne.s32.totalorder %s398, %s414
      %p416 = scmp.eq.s32.totalorder %s50, 0
      %p417 = por %p415, %p416
      %s418 = ssub.s32 %s44, %s51
      %p419 = scmp.eq.s32.totalorder %s418, 0
      %s421 = sadd.s32 %s420, 1
      %s422 = scalar_select %p419, %s420, %s421
      %p425 = pneg %p419
      %p426 = scmp.eq.s32.totalorder %s44, 1
      %p427 = por %p425, %p426
      %p428 = scmp.ne.s32.totalorder %s420, %s423
      %p429 = scmp.eq.s32.totalorder %s44, 0
      %p430 = por %p428, %p429
      %p431 = scmp.ne.s32.totalorder %s420, %s423
      %p432 = scmp.eq.s32.totalorder %s49, 1
      %p433 = por %p431, %p432
      %p434 = scmp.ne.s32.totalorder %s423, %s424
      %p435 = scmp.eq.s32.totalorder %s49, 0
      %p436 = por %p434, %p435
      %p437 = scmp.ne.s32.totalorder %s423, %s424
      %p438 = scmp.eq.s32.totalorder %s50, 1
      %p439 = por %p437, %p438
      %p441 = scmp.ne.s32.totalorder %s424, %s440
      %p442 = scmp.eq.s32.totalorder %s50, 0
      %p443 = por %p441, %p442
      %p444 = scmp.le.s32.totalorder 1, %s44
      %p445 = scmp.lt.s32.totalorder %s44, 3
      %p446 = pnand %p444, %p445
      %p447 = pneg %p446
      // Predicated region
      $region9: #{tpu_custom_call.1} parent=5 // pred_check
        _
      $region10: #{tpu_custom_call.1} parent=5 // pred_check_branch
        %449 = sbr.rel (%p446) target = $region12
      $region11: #{tpu_custom_call.1} parent=5 // pred_region
        %s450 = ssub.s32 %s44, 1
        // Predicated region
        $region13: #{tpu_custom_call.1} parent=11 // pred_check
          %p451 = pneg %p195
        $region14: #{tpu_custom_call.1} parent=11 // pred_check_branch
          %453 = sbr.rel (%p451) target = $region16
        $region15: #{tpu_custom_call.1} parent=11 // pred_region
          %s455 = ssub.s32 256, 256
          %456 = vsyncadd [#allocation13], %s455
          %s457 = sshll.u32 [#allocation12], 4
          %s458 = int_to_ptr.vmem [resolvable:$true] %s457
          %463 = dma.hbm_to_vmem [thread:$0]  %s5, 256, %s458, [#allocation13], 64, 64, 4
        $region16: #{tpu_custom_call.1} parent=11 // pred_fallthru
          _
        // Predicated region
        $region17: #{tpu_custom_call.1} parent=11 // pred_check
          %p464 = pneg %p216
        $region18: #{tpu_custom_call.1} parent=11 // pred_check_branch
          %466 = sbr.rel (%p464) target = $region20
        $region19: #{tpu_custom_call.1} parent=11 // pred_region
          %s468 = ssub.s32 256, 256
          %469 = vsyncadd [#allocation13], %s468
          %s470 = sshll.u32 [#allocation14], 4
          %s471 = int_to_ptr.vmem [resolvable:$true] %s470
          %476 = dma.hbm_to_vmem [thread:$0]  %s6, 256, %s471, [#allocation13], 64, 64, 4
        $region20: #{tpu_custom_call.1} parent=11 // pred_fallthru
          _
        // Predicated region
        $region21: #{tpu_custom_call.1} parent=11 // pred_check
          %p477 = pneg %p237
        $region22: #{tpu_custom_call.1} parent=11 // pred_check_branch
          %479 = sbr.rel (%p477) target = $region24
        $region23: #{tpu_custom_call.1} parent=11 // pred_region
          %s481 = ssub.s32 128, 128
          %482 = vsyncadd [#allocation16], %s481
          %s483 = sshll.u32 [#allocation15], 4
          %s484 = int_to_ptr.vmem [resolvable:$true] %s483
          %489 = dma.hbm_to_vmem [thread:$0]  %s7, 128, %s484, [#allocation16], 64, 64, 4
        $region24: #{tpu_custom_call.1} parent=11 // pred_fallthru
          _
        // Predicated region
        $region25: #{tpu_custom_call.1} parent=11 // pred_check
          %p490 = pneg %p258
        $region26: #{tpu_custom_call.1} parent=11 // pred_check_branch
          %492 = sbr.rel (%p490) target = $region28
        $region27: #{tpu_custom_call.1} parent=11 // pred_region
          %s494 = ssub.s32 16, 16
          %495 = vsyncadd [#allocation16], %s494
          %s497 = sshll.u32 [#allocation17], 4
          %s498 = int_to_ptr.vmem [resolvable:$true] %s497
          %500 = dma.hbm_to_vmem [thread:$0]  %s8, 16, %s498, [#allocation16]
        $region28: #{tpu_custom_call.1} parent=11 // pred_fallthru
          _
        // Predicated region
        $region29: #{tpu_custom_call.1} parent=11 // pred_check
          %p501 = pneg %p279
        $region30: #{tpu_custom_call.1} parent=11 // pred_check_branch
          %503 = sbr.rel (%p501) target = $region32
        $region31: #{tpu_custom_call.1} parent=11 // pred_region
          %s505 = ssub.s32 256, 256
          %506 = vsyncadd [#allocation19], %s505
          %s507 = sshll.u32 [#allocation18], 4
          %s508 = int_to_ptr.vmem [resolvable:$true] %s507
          %513 = dma.hbm_to_vmem [thread:$0]  %s9, 256, %s508, [#allocation19], 64, 64, 4
        $region32: #{tpu_custom_call.1} parent=11 // pred_fallthru
          _
        // Predicated region
        $region33: #{tpu_custom_call.1} parent=11 // pred_check
          %p514 = pneg %p300
        $region34: #{tpu_custom_call.1} parent=11 // pred_check_branch
          %516 = sbr.rel (%p514) target = $region36
        $region35: #{tpu_custom_call.1} parent=11 // pred_region
          %s518 = ssub.s32 16, 16
          %519 = vsyncadd [#allocation19], %s518
          %s521 = sshll.u32 [#allocation20], 4
          %s522 = int_to_ptr.vmem [resolvable:$true] %s521
          %524 = dma.hbm_to_vmem [thread:$0]  %s10, 16, %s522, [#allocation19]
        $region36: #{tpu_custom_call.1} parent=11 // pred_fallthru
          _
        // Predicated region
        $region37: #{tpu_custom_call.1} parent=11 // pred_check
          %p525 = pneg %p321
        $region38: #{tpu_custom_call.1} parent=11 // pred_check_branch
          %527 = sbr.rel (%p525) target = $region40
        $region39: #{tpu_custom_call.1} parent=11 // pred_region
          %s529 = ssub.s32 16, 16
          %530 = vsyncadd [#allocation22], %s529
          %s532 = sshll.u32 [#allocation21], 4
          %s533 = int_to_ptr.vmem [resolvable:$true] %s532
          %535 = dma.hbm_to_vmem [thread:$0]  %s11, 16, %s533, [#allocation22]
        $region40: #{tpu_custom_call.1} parent=11 // pred_fallthru
          _
        // Predicated region
        $region41: #{tpu_custom_call.1} parent=11 // pred_check
          %p536 = pneg %p342
        $region42: #{tpu_custom_call.1} parent=11 // pred_check_branch
          %538 = sbr.rel (%p536) target = $region44
        $region43: #{tpu_custom_call.1} parent=11 // pred_region
          %s540 = ssub.s32 16, 16
          %541 = vsyncadd [#allocation22], %s540
          %s543 = sshll.u32 [#allocation23], 4
          %s544 = int_to_ptr.vmem [resolvable:$true] %s543
          %546 = dma.hbm_to_vmem [thread:$0]  %s12, 16, %s544, [#allocation22]
        $region44: #{tpu_custom_call.1} parent=11 // pred_fallthru
          _
        // Predicated region
        $region45: #{tpu_custom_call.1} parent=11 // pred_check
          %p547 = pneg %p363
        $region46: #{tpu_custom_call.1} parent=11 // pred_check_branch
          %549 = sbr.rel (%p547) target = $region48
        $region47: #{tpu_custom_call.1} parent=11 // pred_region
          %s551 = ssub.s32 16, 16
          %552 = vsyncadd [#allocation25], %s551
          %s554 = sshll.u32 [#allocation24], 4
          %s555 = int_to_ptr.vmem [resolvable:$true] %s554
          %557 = dma.hbm_to_vmem [thread:$0]  %s13, 16, %s555, [#allocation25]
        $region48: #{tpu_custom_call.1} parent=11 // pred_fallthru
          _
        // Predicated region
        $region49: #{tpu_custom_call.1} parent=11 // pred_check
          %p558 = pneg %p384
        $region50: #{tpu_custom_call.1} parent=11 // pred_check_branch
          %560 = sbr.rel (%p558) target = $region52
        $region51: #{tpu_custom_call.1} parent=11 // pred_region
          _
        $region52: #{tpu_custom_call.1} parent=11 // pred_fallthru
          _
      $region12: #{tpu_custom_call.1} parent=5 // pred_fallthru
        _
      %p561 = scmp.lt.s32.totalorder %s44, 2
      // Predicated region
      $region53: #{tpu_custom_call.1} parent=5 // pred_check
        %p562 = pneg %p561
      $region54: #{tpu_custom_call.1} parent=5 // pred_check_branch
        %564 = sbr.rel (%p562) target = $region56
      $region55: #{tpu_custom_call.1} parent=5 // pred_region
        // Predicated region
        $region57: #{tpu_custom_call.1} parent=55 // pred_check
          %p565 = pneg %p64
        $region58: #{tpu_custom_call.1} parent=55 // pred_check_branch
          %567 = sbr.rel (%p565) target = $region60
        $region59: #{tpu_custom_call.1} parent=55 // pred_region
          %s568 = sand.u32 %s54, 1
          %s569 = scalar_lea.sflag [#allocation4], %s568
          %s570 = sand.u32 %s54, 1
          %s571 = smul.addr %s570, 8
          %s572 = scalar_lea.vmem [#allocation3], %s571
          %s574 = ssub.s32 128, 128
          %575 = vsyncadd %s569, %s574
          %s576 = smul.addr %s44, 128
          %s577 = scalar_lea.hbm %s0, %s576
          %s579 = sshll.u32 %s572, 4
          %s580 = int_to_ptr.vmem [resolvable:$true] %s579
          %582 = dma.hbm_to_vmem [thread:$0]  %s577, 128, %s580, %s569
        $region60: #{tpu_custom_call.1} parent=55 // pred_fallthru
          _
        // Predicated region
        $region61: #{tpu_custom_call.1} parent=55 // pred_check
          %p583 = pneg %p90
        $region62: #{tpu_custom_call.1} parent=55 // pred_check_branch
          %585 = sbr.rel (%p583) target = $region64
        $region63: #{tpu_custom_call.1} parent=55 // pred_region
          %s586 = sand.u32 %s44, 1
          %s587 = scalar_lea.sflag [#allocation7], %s586
          %s588 = sand.u32 %s80, 1
          %s589 = smul.addr %s588, 8
          %s590 = scalar_lea.vmem [#allocation6], %s589
          %s592 = ssub.s32 128, 128
          %593 = vsyncadd %s587, %s592
          %s594 = smul.addr %s44, 128
          %s595 = scalar_lea.hbm %s1, %s594
          %s597 = sshll.u32 %s590, 4
          %s598 = int_to_ptr.vmem [resolvable:$true] %s597
          %600 = dma.hbm_to_vmem [thread:$0]  %s595, 128, %s598, %s587
        $region64: #{tpu_custom_call.1} parent=55 // pred_fallthru
          _
        // Predicated region
        $region65: #{tpu_custom_call.1} parent=55 // pred_check
          %p601 = pneg %p116
        $region66: #{tpu_custom_call.1} parent=55 // pred_check_branch
          %603 = sbr.rel (%p601) target = $region68
        $region67: #{tpu_custom_call.1} parent=55 // pred_region
          %s604 = sand.u32 %s44, 1
          %s605 = scalar_lea.sflag [#allocation7], %s604
          %s606 = sand.u32 %s106, 1
          %s607 = smul.addr %s606, 8
          %s608 = scalar_lea.vmem [#allocation8], %s607
          %s610 = ssub.s32 128, 128
          %611 = vsyncadd %s605, %s610
          %s612 = smul.addr %s44, 128
          %s613 = scalar_lea.hbm %s2, %s612
          %s615 = sshll.u32 %s608, 4
          %s616 = int_to_ptr.vmem [resolvable:$true] %s615
          %618 = dma.hbm_to_vmem [thread:$0]  %s613, 128, %s616, %s605
        $region68: #{tpu_custom_call.1} parent=55 // pred_fallthru
          _
        // Predicated region
        $region69: #{tpu_custom_call.1} parent=55 // pred_check
          %p619 = pneg %p142
        $region70: #{tpu_custom_call.1} parent=55 // pred_check_branch
          %621 = sbr.rel (%p619) target = $region72
        $region71: #{tpu_custom_call.1} parent=55 // pred_region
          %s622 = sand.u32 %s44, 1
          %s623 = scalar_lea.sflag [#allocation10], %s622
          %s624 = sand.u32 %s132, 1
          %s625 = smul.addr %s624, 8
          %s626 = scalar_lea.vmem [#allocation9], %s625
          %s628 = ssub.s32 128, 128
          %629 = vsyncadd %s623, %s628
          %s630 = smul.addr %s44, 128
          %s631 = scalar_lea.hbm %s3, %s630
          %s633 = sshll.u32 %s626, 4
          %s634 = int_to_ptr.vmem [resolvable:$true] %s633
          %636 = dma.hbm_to_vmem [thread:$0]  %s631, 128, %s634, %s623
        $region72: #{tpu_custom_call.1} parent=55 // pred_fallthru
          _
        // Predicated region
        $region73: #{tpu_custom_call.1} parent=55 // pred_check
          %p637 = pneg %p168
        $region74: #{tpu_custom_call.1} parent=55 // pred_check_branch
          %639 = sbr.rel (%p637) target = $region76
        $region75: #{tpu_custom_call.1} parent=55 // pred_region
          %s640 = sand.u32 %s44, 1
          %s641 = scalar_lea.sflag [#allocation10], %s640
          %s642 = sand.u32 %s158, 1
          %s643 = smul.addr %s642, 8
          %s644 = scalar_lea.vmem [#allocation11], %s643
          %s646 = ssub.s32 128, 128
          %647 = vsyncadd %s641, %s646
          %s648 = smul.addr %s44, 128
          %s649 = scalar_lea.hbm %s4, %s648
          %s651 = sshll.u32 %s644, 4
          %s652 = int_to_ptr.vmem [resolvable:$true] %s651
          %654 = dma.hbm_to_vmem [thread:$0]  %s649, 128, %s652, %s641
        $region76: #{tpu_custom_call.1} parent=55 // pred_fallthru
          _
      $region56: #{tpu_custom_call.1} parent=5 // pred_fallthru
        _
      %p655 = scmp.le.s32.totalorder 1, %s44
      %p656 = scmp.lt.s32.totalorder %s44, 3
      %p657 = pnand %p655, %p656
      %p658 = pneg %p657
      // Predicated region
      $region77: #{tpu_custom_call.1} parent=5 // pred_check
        _
      $region78: #{tpu_custom_call.1} parent=5 // pred_check_branch
        %660 = sbr.rel (%p657) target = $region80
      $region79: #{tpu_custom_call.1} parent=5 // pred_region
        %s661 = ssub.s32 %s44, 1
        %s662 = sand.u32 %s57, 1
        %s663 = scalar_lea.sflag [#allocation4], %s662
        %s664 = sand.u32 %s57, 1
        %s665 = smul.addr %s664, 8
        %s666 = scalar_lea.vmem [#allocation3], %s665
        // Predicated region
        $region81: #{tpu_custom_call.1} parent=79 // pred_check
          %p667 = pneg %p70
        $region82: #{tpu_custom_call.1} parent=79 // pred_check_branch
          %669 = sbr.rel (%p667) target = $region84
        $region83: #{tpu_custom_call.1} parent=79 // pred_region
          %670 = dma.done %s663, 128
        $region84: #{tpu_custom_call.1} parent=79 // pred_fallthru
          _
        %s671 = sand.u32 %s49, 1
        %s672 = scalar_lea.sflag [#allocation7], %s671
        %s673 = sand.u32 %s83, 1
        %s674 = smul.addr %s673, 8
        %s675 = scalar_lea.vmem [#allocation6], %s674
        // Predicated region
        $region85: #{tpu_custom_call.1} parent=79 // pred_check
          %p676 = pneg %p96
        $region86: #{tpu_custom_call.1} parent=79 // pred_check_branch
          %678 = sbr.rel (%p676) target = $region88
        $region87: #{tpu_custom_call.1} parent=79 // pred_region
          %679 = dma.done %s672, 128
        $region88: #{tpu_custom_call.1} parent=79 // pred_fallthru
          _
        %s680 = sand.u32 %s49, 1
        %s681 = scalar_lea.sflag [#allocation7], %s680
        %s682 = sand.u32 %s109, 1
        %s683 = smul.addr %s682, 8
        %s684 = scalar_lea.vmem [#allocation8], %s683
        // Predicated region
        $region89: #{tpu_custom_call.1} parent=79 // pred_check
          %p685 = pneg %p122
        $region90: #{tpu_custom_call.1} parent=79 // pred_check_branch
          %687 = sbr.rel (%p685) target = $region92
        $region91: #{tpu_custom_call.1} parent=79 // pred_region
          %688 = dma.done %s681, 128
        $region92: #{tpu_custom_call.1} parent=79 // pred_fallthru
          _
        %s689 = sand.u32 %s49, 1
        %s690 = scalar_lea.sflag [#allocation10], %s689
        %s691 = sand.u32 %s135, 1
        %s692 = smul.addr %s691, 8
        %s693 = scalar_lea.vmem [#allocation9], %s692
        // Predicated region
        $region93: #{tpu_custom_call.1} parent=79 // pred_check
          %p694 = pneg %p148
        $region94: #{tpu_custom_call.1} parent=79 // pred_check_branch
          %696 = sbr.rel (%p694) target = $region96
        $region95: #{tpu_custom_call.1} parent=79 // pred_region
          %697 = dma.done %s690, 128
        $region96: #{tpu_custom_call.1} parent=79 // pred_fallthru
          _
        %s698 = sand.u32 %s49, 1
        %s699 = scalar_lea.sflag [#allocation10], %s698
        %s700 = sand.u32 %s161, 1
        %s701 = smul.addr %s700, 8
        %s702 = scalar_lea.vmem [#allocation11], %s701
        // Predicated region
        $region97: #{tpu_custom_call.1} parent=79 // pred_check
          %p703 = pneg %p174
        $region98: #{tpu_custom_call.1} parent=79 // pred_check_branch
          %705 = sbr.rel (%p703) target = $region100
        $region99: #{tpu_custom_call.1} parent=79 // pred_region
          %706 = dma.done %s699, 128
        $region100: #{tpu_custom_call.1} parent=79 // pred_fallthru
          _
        // Predicated region
        $region101: #{tpu_custom_call.1} parent=79 // pred_check
          %p707 = pneg %p195
        $region102: #{tpu_custom_call.1} parent=79 // pred_check_branch
          %709 = sbr.rel (%p707) target = $region104
        $region103: #{tpu_custom_call.1} parent=79 // pred_region
          %710 = dma.done [#allocation13], 256
        $region104: #{tpu_custom_call.1} parent=79 // pred_fallthru
          _
        // Predicated region
        $region105: #{tpu_custom_call.1} parent=79 // pred_check
          %p711 = pneg %p216
        $region106: #{tpu_custom_call.1} parent=79 // pred_check_branch
          %713 = sbr.rel (%p711) target = $region108
        $region107: #{tpu_custom_call.1} parent=79 // pred_region
          %714 = dma.done [#allocation13], 256
        $region108: #{tpu_custom_call.1} parent=79 // pred_fallthru
          _
        // Predicated region
        $region109: #{tpu_custom_call.1} parent=79 // pred_check
          %p715 = pneg %p237
        $region110: #{tpu_custom_call.1} parent=79 // pred_check_branch
          %717 = sbr.rel (%p715) target = $region112
        $region111: #{tpu_custom_call.1} parent=79 // pred_region
          %718 = dma.done [#allocation16], 128
        $region112: #{tpu_custom_call.1} parent=79 // pred_fallthru
          _
        // Predicated region
        $region113: #{tpu_custom_call.1} parent=79 // pred_check
          %p719 = pneg %p258
        $region114: #{tpu_custom_call.1} parent=79 // pred_check_branch
          %721 = sbr.rel (%p719) target = $region116
        $region115: #{tpu_custom_call.1} parent=79 // pred_region
          %722 = dma.done [#allocation16], 16
        $region116: #{tpu_custom_call.1} parent=79 // pred_fallthru
          _
        // Predicated region
        $region117: #{tpu_custom_call.1} parent=79 // pred_check
          %p723 = pneg %p279
        $region118: #{tpu_custom_call.1} parent=79 // pred_check_branch
          %725 = sbr.rel (%p723) target = $region120
        $region119: #{tpu_custom_call.1} parent=79 // pred_region
          %726 = dma.done [#allocation19], 256
        $region120: #{tpu_custom_call.1} parent=79 // pred_fallthru
          _
        // Predicated region
        $region121: #{tpu_custom_call.1} parent=79 // pred_check
          %p727 = pneg %p300
        $region122: #{tpu_custom_call.1} parent=79 // pred_check_branch
          %729 = sbr.rel (%p727) target = $region124
        $region123: #{tpu_custom_call.1} parent=79 // pred_region
          %730 = dma.done [#allocation19], 16
        $region124: #{tpu_custom_call.1} parent=79 // pred_fallthru
          _
        // Predicated region
        $region125: #{tpu_custom_call.1} parent=79 // pred_check
          %p731 = pneg %p321
        $region126: #{tpu_custom_call.1} parent=79 // pred_check_branch
          %733 = sbr.rel (%p731) target = $region128
        $region127: #{tpu_custom_call.1} parent=79 // pred_region
          %734 = dma.done [#allocation22], 16
        $region128: #{tpu_custom_call.1} parent=79 // pred_fallthru
          _
        // Predicated region
        $region129: #{tpu_custom_call.1} parent=79 // pred_check
          %p735 = pneg %p342
        $region130: #{tpu_custom_call.1} parent=79 // pred_check_branch
          %737 = sbr.rel (%p735) target = $region132
        $region131: #{tpu_custom_call.1} parent=79 // pred_region
          %738 = dma.done [#allocation22], 16
        $region132: #{tpu_custom_call.1} parent=79 // pred_fallthru
          _
        // Predicated region
        $region133: #{tpu_custom_call.1} parent=79 // pred_check
          %p739 = pneg %p363
        $region134: #{tpu_custom_call.1} parent=79 // pred_check_branch
          %741 = sbr.rel (%p739) target = $region136
        $region135: #{tpu_custom_call.1} parent=79 // pred_region
          %742 = dma.done [#allocation25], 16
        $region136: #{tpu_custom_call.1} parent=79 // pred_fallthru
          _
        %s743 = sand.u32 %s57, 1
        %s744 = scalar_lea.sflag [#allocation4], %s743
        %s745 = sand.u32 %s57, 1
        %s746 = smul.addr %s745, 8
        %s747 = scalar_lea.vmem [#allocation3], %s746
        %p748 = pneg %p70
        %p749 = pneg %p67
        %s750 = sand.u32 %s49, 1
        %s751 = scalar_lea.sflag [#allocation7], %s750
        %s752 = sand.u32 %s83, 1
        %s753 = smul.addr %s752, 8
        %s754 = scalar_lea.vmem [#allocation6], %s753
        %p755 = pneg %p96
        %p756 = pneg %p93
        %s757 = sand.u32 %s49, 1
        %s758 = scalar_lea.sflag [#allocation7], %s757
        %s759 = sand.u32 %s109, 1
        %s760 = smul.addr %s759, 8
        %s761 = scalar_lea.vmem [#allocation8], %s760
        %p762 = pneg %p122
        %p763 = pneg %p119
        %s764 = sand.u32 %s49, 1
        %s765 = scalar_lea.sflag [#allocation10], %s764
        %s766 = sand.u32 %s135, 1
        %s767 = smul.addr %s766, 8
        %s768 = scalar_lea.vmem [#allocation9], %s767
        %p769 = pneg %p148
        %p770 = pneg %p145
        %s771 = sand.u32 %s49, 1
        %s772 = scalar_lea.sflag [#allocation10], %s771
        %s773 = sand.u32 %s161, 1
        %s774 = smul.addr %s773, 8
        %s775 = scalar_lea.vmem [#allocation11], %s774
        %p776 = pneg %p174
        %p777 = pneg %p171
        %p778 = pneg %p195
        %p779 = pneg %p192
        %p780 = pneg %p216
        %p781 = pneg %p213
        %p782 = pneg %p237
        %p783 = pneg %p234
        %p784 = pneg %p258
        %p785 = pneg %p255
        %p786 = pneg %p279
        %p787 = pneg %p276
        %p788 = pneg %p300
        %p789 = pneg %p297
        %p790 = pneg %p321
        %p791 = pneg %p318
        %p792 = pneg %p342
        %p793 = pneg %p339
        %p794 = pneg %p363
        %p795 = pneg %p360
        %p796 = pneg %p384
        %p797 = pneg %p381
        %p798 = pneg %p410
        %p799 = pneg %p407
        %s800 = sand.u32 %s397, 1
        %s801 = scalar_lea.sflag [#allocation5], %s800
        %s802 = sand.u32 %s397, 1
        %s803 = smul.addr %s802, 8
        %s804 = scalar_lea.vmem [#allocation26], %s803
        %p805 = pneg %p436
        %p806 = pneg %p433
        %s807 = sand.u32 %s423, 1
        %s808 = scalar_lea.sflag [#allocation28], %s807
        %s809 = sand.u32 %s423, 1
        %s810 = smul.addr %s809, 8
        %s811 = scalar_lea.vmem [#allocation27], %s810
        %v813 = vld [vmem:[%s666] sm:$0xff]
        %v814 = vld [vmem:[%s675] sm:$0xff]
        %v815 = vld [vmem:[%s684] sm:$0xff]
        %v816 = vpack.c.bf16 %v813, %v813
        %v817 = vpack.c.bf16 %v814, %v814
        %v818 = vpack.c.bf16 %v815, %v815
        %v819 = vld [vmem:[#allocation12] sm:$0xf]
        %v820 = vld [vmem:[#allocation12 + $0x4] sm:$0xf]
        %v821 = vld [vmem:[#allocation12 + $0x8] sm:$0xf]
        %v822 = vld [vmem:[#allocation12 + $0xc] sm:$0xf]
        %v823 = vld [vmem:[#allocation14] sm:$0xf]
        %v824 = vld [vmem:[#allocation14 + $0x4] sm:$0xf]
        %v825 = vld [vmem:[#allocation14 + $0x8] sm:$0xf]
        %v826 = vld [vmem:[#allocation14 + $0xc] sm:$0xf]
        %v831 = vunpack.c.l.b16 %v823
        %v832 = vunpack.c.l.b16 %v824
        %v833 = vunpack.c.l.b16 %v825
        %v834 = vunpack.c.l.b16 %v826
        %v835 = vpack.c.b16 %v832, %v831
        %v836 = vpack.c.b16 %v834, %v833
        %vm839 = vcmask 261120
        %v841 = vsel %vm839, %v817, 0
        %843 = vmatprep.subr.bf16.mxu0 0
        %844 = vmatpush1.bf16.msra.mxu0 %v835
        %845 = vmatprep.subr.bf16.mxu0 0
        %846 = vmatpush1.bf16.msra.mxu0 %v836
        %847 = vmatprep.subr.bf16.mxu0 0
        %848 = vmatpush1.bf16.msra.mxu0 0
        %849 = vmatprep.subr.bf16.mxu0 0
        %850 = vmatpush1.bf16.msra.mxu0 0
        %851 = vmatprep.subr.bf16.mxu0 0
        %852 = vmatpush1.bf16.msra.mxu0 0
        %853 = vmatprep.subr.bf16.mxu0 0
        %854 = vmatpush1.bf16.msra.mxu0 0
        %855 = vmatprep.subr.bf16.mxu0 0
        %856 = vmatpush1.bf16.msra.mxu0 0
        %857 = vmatprep.subr.bf16.mxu0 0
        %858 = vmatpush1.bf16.msra.mxu0 0
        %859 = vmatprep.subr.bf16.mxu0 0
        %860 = vmatpush1.bf16.msra.mxu0 0
        %861 = vmatprep.subr.bf16.mxu0 0
        %862 = vmatpush1.bf16.msra.mxu0 0
        %863 = vmatprep.subr.bf16.mxu0 0
        %864 = vmatpush1.bf16.msra.mxu0 0
        %865 = vmatprep.subr.bf16.mxu0 0
        %866 = vmatpush1.bf16.msra.mxu0 0
        %867 = vmatprep.subr.bf16.mxu0 0
        %868 = vmatpush1.bf16.msra.mxu0 0
        %869 = vmatprep.subr.bf16.mxu0 0
        %870 = vmatpush1.bf16.msra.mxu0 0
        %871 = vmatprep.subr.bf16.mxu0 0
        %872 = vmatpush1.bf16.msra.mxu0 0
        %873 = vmatprep.subr.bf16.mxu0 0
        %874 = vmatpush1.bf16.msra.mxu0 0
        %875 = vmatprep.mubr.bf16.mxu0 0
        %876 = vmatmul.mubr.bf16.gmra.mrb[0].mxu0 %v841
        %v877 = vpop.f32.mrb[0].mxu0
        %v878 = vadd.f32 0.0, %v877
        %v879 = vpop.f32.mrb[0].mxu0
        %v880 = vpop.f32.mrb[0].mxu0
        %v881 = vpop.f32.mrb[0].mxu0
        %882 = vdwg.mxu0
        %v887 = vunpack.c.l.b16 %v819
        %v888 = vunpack.c.l.b16 %v820
        %v889 = vunpack.c.l.b16 %v821
        %v890 = vunpack.c.l.b16 %v822
        %v891 = vpack.c.b16 %v888, %v887
        %v892 = vpack.c.b16 %v890, %v889
        %v896 = vsel %vm839, %v816, 0
        %898 = vmatprep.subr.bf16.mxu0 0
        %899 = vmatpush1.bf16.msra.mxu0 %v891
        %900 = vmatprep.subr.bf16.mxu0 0
        %901 = vmatpush1.bf16.msra.mxu0 %v892
        %902 = vmatprep.subr.bf16.mxu0 0
        %903 = vmatpush1.bf16.msra.mxu0 0
        %904 = vmatprep.subr.bf16.mxu0 0
        %905 = vmatpush1.bf16.msra.mxu0 0
        %906 = vmatprep.subr.bf16.mxu0 0
        %907 = vmatpush1.bf16.msra.mxu0 0
        %908 = vmatprep.subr.bf16.mxu0 0
        %909 = vmatpush1.bf16.msra.mxu0 0
        %910 = vmatprep.subr.bf16.mxu0 0
        %911 = vmatpush1.bf16.msra.mxu0 0
        %912 = vmatprep.subr.bf16.mxu0 0
        %913 = vmatpush1.bf16.msra.mxu0 0
        %914 = vmatprep.subr.bf16.mxu0 0
        %915 = vmatpush1.bf16.msra.mxu0 0
        %916 = vmatprep.subr.bf16.mxu0 0
        %917 = vmatpush1.bf16.msra.mxu0 0
        %918 = vmatprep.subr.bf16.mxu0 0
        %919 = vmatpush1.bf16.msra.mxu0 0
        %920 = vmatprep.subr.bf16.mxu0 0
        %921 = vmatpush1.bf16.msra.mxu0 0
        %922 = vmatprep.subr.bf16.mxu0 0
        %923 = vmatpush1.bf16.msra.mxu0 0
        %924 = vmatprep.subr.bf16.mxu0 0
        %925 = vmatpush1.bf16.msra.mxu0 0
        %926 = vmatprep.subr.bf16.mxu0 0
        %927 = vmatpush1.bf16.msra.mxu0 0
        %928 = vmatprep.subr.bf16.mxu0 0
        %929 = vmatpush1.bf16.msra.mxu0 0
        %930 = vmatprep.mubr.bf16.mxu0 0
        %931 = vmatmul.mubr.bf16.gmra.mrb[0].mxu0 %v896
        %v932 = vpop.f32.mrb[0].mxu0
        %v933 = vadd.f32 %v878, %v932
        %v934 = vpop.f32.mrb[0].mxu0
        %v935 = vpop.f32.mrb[0].mxu0
        %v936 = vpop.f32.mrb[0].mxu0
        %937 = vdwg.mxu0
        %v938 = vld [vmem:[#allocation15] sm:$0xf]
        %v939 = vld [vmem:[#allocation15 + $0x4] sm:$0xf]
        %v942 = vunpack.c.l.b16 %v938
        %v943 = vunpack.c.l.b16 %v939
        %v944 = vpack.c.b16 %v943, %v942
        %vm946 = vcmask 130048
        %v948 = vsel %vm946, %v818, 0
        %950 = vmatprep.subr.bf16.mxu0 0
        %951 = vmatpush1.bf16.msra.mxu0 %v944
        %952 = vmatprep.subr.bf16.mxu0 0
        %953 = vmatpush1.bf16.msra.mxu0 0
        %954 = vmatprep.subr.bf16.mxu0 0
        %955 = vmatpush1.bf16.msra.mxu0 0
        %956 = vmatprep.subr.bf16.mxu0 0
        %957 = vmatpush1.bf16.msra.mxu0 0
        %958 = vmatprep.subr.bf16.mxu0 0
        %959 = vmatpush1.bf16.msra.mxu0 0
        %960 = vmatprep.subr.bf16.mxu0 0
        %961 = vmatpush1.bf16.msra.mxu0 0
        %962 = vmatprep.subr.bf16.mxu0 0
        %963 = vmatpush1.bf16.msra.mxu0 0
        %964 = vmatprep.subr.bf16.mxu0 0
        %965 = vmatpush1.bf16.msra.mxu0 0
        %966 = vmatprep.subr.bf16.mxu0 0
        %967 = vmatpush1.bf16.msra.mxu0 0
        %968 = vmatprep.subr.bf16.mxu0 0
        %969 = vmatpush1.bf16.msra.mxu0 0
        %970 = vmatprep.subr.bf16.mxu0 0
        %971 = vmatpush1.bf16.msra.mxu0 0
        %972 = vmatprep.subr.bf16.mxu0 0
        %973 = vmatpush1.bf16.msra.mxu0 0
        %974 = vmatprep.subr.bf16.mxu0 0
        %975 = vmatpush1.bf16.msra.mxu0 0
        %976 = vmatprep.subr.bf16.mxu0 0
        %977 = vmatpush1.bf16.msra.mxu0 0
        %978 = vmatprep.subr.bf16.mxu0 0
        %979 = vmatpush1.bf16.msra.mxu0 0
        %980 = vmatprep.subr.bf16.mxu0 0
        %981 = vmatpush1.bf16.msra.mxu0 0
        %982 = vmatprep.mubr.bf16.mxu0 0
        %983 = vmatmul.mubr.bf16.gmra.mrb[0].mxu0 %v948
        %v984 = vpop.f32.mrb[0].mxu0
        %v985 = vadd.f32 0.0, %v984
        %v986 = vpop.f32.mrb[0].mxu0
        %v987 = vpop.f32.mrb[0].mxu0
        %v988 = vpop.f32.mrb[0].mxu0
        %989 = vdwg.mxu0
        %v990 = vadd.f32 %v933, %v985
        %v991 = vld [vmem:[#allocation17] sm:$0x1]
        %v993 = vlaneseq
        %v994 = vshrl.u32 %v993, 7
        %v995 = vsub.s32 0, %v994
        %v996 = vrot.slane %v991, %v995
        %v998 = vadd.f32 %v990, %v996
        %v999 = vtanh.pop %v998
        %v1000 = vpack.c.bf16 %v999, %v999
        %v1001 = vld [vmem:[#allocation18] sm:$0xf]
        %v1002 = vld [vmem:[#allocation18 + $0x4] sm:$0xf]
        %v1003 = vld [vmem:[#allocation18 + $0x8] sm:$0xf]
        %v1004 = vld [vmem:[#allocation18 + $0xc] sm:$0xf]
        %v1005 = vld [vmem:[#allocation20] sm:$0x1]
        %v1007 = vlaneseq
        %v1008 = vshrl.u32 %v1007, 7
        %v1009 = vsub.s32 0, %v1008
        %v1010 = vrot.slane %v1005, %v1009
        %v1016 = vunpack.c.l.b16 %v1001
        %v1017 = vunpack.c.l.b16 %v1002
        %v1018 = vunpack.c.l.b16 %v1003
        %v1019 = vunpack.c.l.b16 %v1004
        %v1020 = vpack.c.b16 %v1017, %v1016
        %v1021 = vpack.c.b16 %v1019, %v1018
        %v1025 = vsel %vm839, %v1000, 0
        %1027 = vmatprep.subr.bf16.mxu0 0
        %1028 = vmatpush1.bf16.msra.mxu0 %v1020
        %1029 = vmatprep.subr.bf16.mxu0 0
        %1030 = vmatpush1.bf16.msra.mxu0 %v1021
        %1031 = vmatprep.subr.bf16.mxu0 0
        %1032 = vmatpush1.bf16.msra.mxu0 0
        %1033 = vmatprep.subr.bf16.mxu0 0
        %1034 = vmatpush1.bf16.msra.mxu0 0
        %1035 = vmatprep.subr.bf16.mxu0 0
        %1036 = vmatpush1.bf16.msra.mxu0 0
        %1037 = vmatprep.subr.bf16.mxu0 0
        %1038 = vmatpush1.bf16.msra.mxu0 0
        %1039 = vmatprep.subr.bf16.mxu0 0
        %1040 = vmatpush1.bf16.msra.mxu0 0
        %1041 = vmatprep.subr.bf16.mxu0 0
        %1042 = vmatpush1.bf16.msra.mxu0 0
        %1043 = vmatprep.subr.bf16.mxu0 0
        %1044 = vmatpush1.bf16.msra.mxu0 0
        %1045 = vmatprep.subr.bf16.mxu0 0
        %1046 = vmatpush1.bf16.msra.mxu0 0
        %1047 = vmatprep.subr.bf16.mxu0 0
        %1048 = vmatpush1.bf16.msra.mxu0 0
        %1049 = vmatprep.subr.bf16.mxu0 0
        %1050 = vmatpush1.bf16.msra.mxu0 0
        %1051 = vmatprep.subr.bf16.mxu0 0
        %1052 = vmatpush1.bf16.msra.mxu0 0
        %1053 = vmatprep.subr.bf16.mxu0 0
        %1054 = vmatpush1.bf16.msra.mxu0 0
        %1055 = vmatprep.subr.bf16.mxu0 0
        %1056 = vmatpush1.bf16.msra.mxu0 0
        %1057 = vmatprep.subr.bf16.mxu0 0
        %1058 = vmatpush1.bf16.msra.mxu0 0
        %1059 = vmatprep.mubr.bf16.mxu0 0
        %1060 = vmatmul.mubr.bf16.gmra.mrb[0].mxu0 %v1025
        %v1061 = vpop.f32.mrb[0].mxu0
        %v1062 = vadd.f32 %v1010, %v1061
        %v1063 = vpop.f32.mrb[0].mxu0
        %v1064 = vpop.f32.mrb[0].mxu0
        %v1065 = vpop.f32.mrb[0].mxu0
        %1066 = vdwg.mxu0
        %1067 = vmax.xlane.f32.xlu0 %v1062
        %v1068 = vpop.xlane.xlu0 %1067
        %v1069 = vsub.f32 %v1062, %v1068
        %v1070 = vmul.f32 %v1069, 1.442695
        %v1071 = vpow.pop %v1070
        %1072 = vadd.xlane.f32.xlu0 %v1071
        %v1073 = vpop.xlane.xlu0 %1072
        %v1074 = vrcp.pop %v1073
        %v1075 = vmul.f32 %v1071, %v1074
        %v1076 = vld [vmem:[#allocation21] sm:$0x1]
        %v1078 = vlaneseq
        %v1079 = vshrl.u32 %v1078, 7
        %v1080 = vsub.s32 0, %v1079
        %v1081 = vrot.slane %v1076, %v1080
        %v1083 = vmul.f32 %v813, %v1081
        %v1084 = vsel %vm839, %v1083, 0.0
        %1085 = vadd.xlane.f32.xlu0 %v1084
        %v1086 = vpop.xlane.xlu0 %1085
        %v1087 = vld [vmem:[#allocation23] sm:$0x1]
        %v1089 = vlaneseq
        %v1090 = vshrl.u32 %v1089, 7
        %v1091 = vsub.s32 0, %v1090
        %v1092 = vrot.slane %v1087, %v1091
        %v1094 = vmul.f32 %v814, %v1092
        %v1095 = vsel %vm839, %v1094, 0.0
        %1096 = vadd.xlane.f32.xlu0 %v1095
        %v1097 = vpop.xlane.xlu0 %1096
        %v1098 = vadd.f32 %v1086, %v1097
        %v1099 = vld [vmem:[#allocation24] sm:$0x1]
        %v1101 = vlaneseq
        %v1102 = vshrl.u32 %v1101, 7
        %v1103 = vsub.s32 0, %v1102
        %v1104 = vrot.slane %v1099, %v1103
        %v1106 = vmul.f32 %v815, %v1104
        %v1107 = vsel %vm946, %v1106, 0.0
        %1108 = vadd.xlane.f32.xlu0 %v1107
        %v1109 = vpop.xlane.xlu0 %1108
        %v1110 = vadd.f32 %v1098, %v1109
        %s1111 = sld [smem:[#allocation2]]
        %v1112 = vstv %s1111
        %v1113 = vadd.f32 %v1110, %v1112
        %v1114 = vxor.u32 %v1113, 2147483648
        %v1115 = vmul.f32 %v1114, 1.442695
        %v1116 = vpow.pop %v1115
        %v1117 = vadd.f32 %v1116, 1.0
        %v1118 = vrcp.pop %v1117
        %v1119 = vmul.f32 1.0, %v1118
        %v1120 = vmax.f32 %v1119, 0.001
        %v1121 = vmin.f32 %v1120, 0.999
        %v1122 = vsub.f32 1.0, %v1121
        %vm1123 = vcmask 7168
        %1124 = vst.msk [vmem:[%s811] sm:$0xff] %vm1123, %v1122
        %v1125 = vld [vmem:[%s693] sm:$0xff]
        %v1126 = vld [vmem:[%s702] sm:$0xff]
        %v1127 = vmul.f32 %v1122, %v1126
        %v1128 = vlaneseq
        %v1129 = vand.u32 %v1128, 127
        %v1130 = vmul.f32 %v1121, %v1075
        %1131 = vset.pattern.permute.xlu0 0
        %1132 = vperm.xlu0 %1131, %v1125
        %v1133 = vpop.permute.xlu0 %1132
        %vm1134 = vcmp.eq.s32.totalorder %v1133, %v1129
        %1136 = vset.pattern.permute.xlu0 0
        %1137 = vperm.xlu0 %1136, %v1127
        %v1138 = vpop.permute.xlu0 %1137
        %v1140 = vsel %vm1134, %v1138, 0.0
        %v1141 = vadd.f32 %v1130, %v1140
        %1142 = vset.pattern.permute.xlu0 1
        %1143 = vperm.xlu0 %1142, %v1125
        %v1144 = vpop.permute.xlu0 %1143
        %vm1145 = vcmp.eq.s32.totalorder %v1144, %v1129
        %1146 = vset.pattern.permute.xlu0 1
        %1147 = vperm.xlu0 %1146, %v1127
        %v1148 = vpop.permute.xlu0 %1147
        %v1150 = vsel %vm1145, %v1148, 0.0
        %v1151 = vadd.f32 %v1141, %v1150
        %1152 = vset.pattern.permute.xlu0 2
        %1153 = vperm.xlu0 %1152, %v1125
        %v1154 = vpop.permute.xlu0 %1153
        %vm1155 = vcmp.eq.s32.totalorder %v1154, %v1129
        %1156 = vset.pattern.permute.xlu0 2
        %1157 = vperm.xlu0 %1156, %v1127
        %v1158 = vpop.permute.xlu0 %1157
        %v1160 = vsel %vm1155, %v1158, 0.0
        %v1161 = vadd.f32 %v1151, %v1160
        %1162 = vset.pattern.permute.xlu0 3
        %1163 = vperm.xlu0 %1162, %v1125
        %v1164 = vpop.permute.xlu0 %1163
        %vm1165 = vcmp.eq.s32.totalorder %v1164, %v1129
        %1166 = vset.pattern.permute.xlu0 3
        %1167 = vperm.xlu0 %1166, %v1127
        %v1168 = vpop.permute.xlu0 %1167
        %v1170 = vsel %vm1165, %v1168, 0.0
        %v1171 = vadd.f32 %v1161, %v1170
        %1172 = vset.pattern.permute.xlu0 4
        %1173 = vperm.xlu0 %1172, %v1125
        %v1174 = vpop.permute.xlu0 %1173
        %vm1175 = vcmp.eq.s32.totalorder %v1174, %v1129
        %1176 = vset.pattern.permute.xlu0 4
        %1177 = vperm.xlu0 %1176, %v1127
        %v1178 = vpop.permute.xlu0 %1177
        %v1180 = vsel %vm1175, %v1178, 0.0
        %v1181 = vadd.f32 %v1171, %v1180
        %1182 = vset.pattern.permute.xlu0 5
        %1183 = vperm.xlu0 %1182, %v1125
        %v1184 = vpop.permute.xlu0 %1183
        %vm1185 = vcmp.eq.s32.totalorder %v1184, %v1129
        %1186 = vset.pattern.permute.xlu0 5
        %1187 = vperm.xlu0 %1186, %v1127
        %v1188 = vpop.permute.xlu0 %1187
        %v1190 = vsel %vm1185, %v1188, 0.0
        %v1191 = vadd.f32 %v1181, %v1190
        %1192 = vset.pattern.permute.xlu0 6
        %1193 = vperm.xlu0 %1192, %v1125
        %v1194 = vpop.permute.xlu0 %1193
        %vm1195 = vcmp.eq.s32.totalorder %v1194, %v1129
        %1196 = vset.pattern.permute.xlu0 6
        %1197 = vperm.xlu0 %1196, %v1127
        %v1198 = vpop.permute.xlu0 %1197
        %v1200 = vsel %vm1195, %v1198, 0.0
        %v1201 = vadd.f32 %v1191, %v1200
        %1202 = vset.pattern.permute.xlu0 7
        %1203 = vperm.xlu0 %1202, %v1125
        %v1204 = vpop.permute.xlu0 %1203
        %vm1205 = vcmp.eq.s32.totalorder %v1204, %v1129
        %1206 = vset.pattern.permute.xlu0 7
        %1207 = vperm.xlu0 %1206, %v1127
        %v1208 = vpop.permute.xlu0 %1207
        %v1210 = vsel %vm1205, %v1208, 0.0
        %v1211 = vadd.f32 %v1201, %v1210
        %1212 = vst [vmem:[%s804] sm:$0xff] %v1211
        %s1213 = sand.u32 %s397, 1
        %s1214 = scalar_lea.sflag [#allocation5], %s1213
        %s1215 = sand.u32 %s397, 1
        %s1216 = smul.addr %s1215, 8
        %s1217 = scalar_lea.vmem [#allocation26], %s1216
        %s1218 = sand.u32 %s423, 1
        %s1219 = scalar_lea.sflag [#allocation28], %s1218
        %s1220 = sand.u32 %s423, 1
        %s1221 = smul.addr %s1220, 8
        %s1222 = scalar_lea.vmem [#allocation27], %s1221
        // Predicated region
        $region137: #{tpu_custom_call.1} parent=79 // pred_check
          %p1223 = pneg %p407
        $region138: #{tpu_custom_call.1} parent=79 // pred_check_branch
          %1225 = sbr.rel (%p1223) target = $region140
        $region139: #{tpu_custom_call.1} parent=79 // pred_region
          %s1227 = ssub.s32 128, 128
          %1228 = vsyncadd %s1214, %s1227
          %s1229 = smul.addr %s49, 128
          %s1230 = scalar_lea.hbm %s15, %s1229
          %s1232 = sshll.u32 %s1217, 4
          %s1233 = int_to_ptr.vmem [resolvable:$true] %s1232
          %1235 = dma.vmem_to_hbm [thread:$0]  %s1233, 128, %s1230, %s1214
        $region140: #{tpu_custom_call.1} parent=79 // pred_fallthru
          _
        // Predicated region
        $region141: #{tpu_custom_call.1} parent=79 // pred_check
          %p1236 = pneg %p433
        $region142: #{tpu_custom_call.1} parent=79 // pred_check_branch
          %1238 = sbr.rel (%p1236) target = $region144
        $region143: #{tpu_custom_call.1} parent=79 // pred_region
          %s1240 = ssub.s32 128, 128
          %1241 = vsyncadd %s1219, %s1240
          %s1242 = smul.addr %s49, 128
          %s1243 = scalar_lea.hbm %s16, %s1242
          %s1245 = sshll.u32 %s1222, 4
          %s1246 = int_to_ptr.vmem [resolvable:$true] %s1245
          %1248 = dma.vmem_to_hbm [thread:$0]  %s1246, 128, %s1243, %s1219
        $region144: #{tpu_custom_call.1} parent=79 // pred_fallthru
          _
      $region80: #{tpu_custom_call.1} parent=5 // pred_fallthru
        _
      %p1249 = scmp.le.s32.totalorder 2, %s44
      // Predicated region
      $region145: #{tpu_custom_call.1} parent=5 // pred_check
        %p1250 = pneg %p1249
      $region146: #{tpu_custom_call.1} parent=5 // pred_check_branch
        %1252 = sbr.rel (%p1250) target = $region148
      $region147: #{tpu_custom_call.1} parent=5 // pred_region
        %s1253 = ssub.s32 %s44, 2
        // Predicated region
        $region149: #{tpu_custom_call.1} parent=147 // pred_check
          %p1254 = pneg %p413
        $region150: #{tpu_custom_call.1} parent=147 // pred_check_branch
          %1256 = sbr.rel (%p1254) target = $region152
        $region151: #{tpu_custom_call.1} parent=147 // pred_region
          %s1257 = sand.u32 %s398, 1
          %s1258 = scalar_lea.sflag [#allocation5], %s1257
          %s1259 = sand.u32 %s398, 1
          %s1260 = smul.addr %s1259, 8
          %s1261 = scalar_lea.vmem [#allocation26], %s1260
          %1262 = dma.done %s1258, 128
        $region152: #{tpu_custom_call.1} parent=147 // pred_fallthru
          _
        // Predicated region
        $region153: #{tpu_custom_call.1} parent=147 // pred_check
          %p1263 = pneg %p439
        $region154: #{tpu_custom_call.1} parent=147 // pred_check_branch
          %1265 = sbr.rel (%p1263) target = $region156
        $region155: #{tpu_custom_call.1} parent=147 // pred_region
          %s1266 = sand.u32 %s424, 1
          %s1267 = scalar_lea.sflag [#allocation28], %s1266
          %s1268 = sand.u32 %s424, 1
          %s1269 = smul.addr %s1268, 8
          %s1270 = scalar_lea.vmem [#allocation27], %s1269
          %1271 = dma.done %s1267, 128
        $region156: #{tpu_custom_call.1} parent=147 // pred_fallthru
          _
      $region148: #{tpu_custom_call.1} parent=5 // pred_fallthru
        _
    $region6: #{tpu_custom_call.1} parent=1 // loop_footer
      %s48 = sadd.s32 1, %s44
    $region7: #{tpu_custom_call.1} parent=1 // loop_footer_branch
      %43 = sbr.rel target = $region3
    $region8: #{tpu_custom_call.1} parent=1 // loop_exit
      _
    %1272 = vsyncpa [#allocation4], 1
    %s1273 = scalar_lea.sflag [#allocation4], 1
    %1274 = vsyncpa %s1273, 1
    %1275 = vsyncpa [#allocation7], 1
    %s1276 = scalar_lea.sflag [#allocation7], 1
    %1277 = vsyncpa %s1276, 1
    %1278 = vsyncpa [#allocation10], 1
    %s1279 = scalar_lea.sflag [#allocation10], 1
    %1280 = vsyncpa %s1279, 1
    %1281 = vsyncpa [#allocation13], 1
    %1282 = vsyncpa [#allocation16], 1
    %1283 = vsyncpa [#allocation19], 1
    %1284 = vsyncpa [#allocation22], 1
    %1285 = vsyncpa [#allocation25], 1
    %1286 = vsyncpa [#allocation5], 1
    %s1287 = scalar_lea.sflag [#allocation5], 1
    %1288 = vsyncpa %s1287, 1
    %1289 = vsyncpa [#allocation28], 1
    %s1290 = scalar_lea.sflag [#allocation28], 1
    %1291 = vsyncpa %s1290, 1

</llo_original>
